<compile_context>
chip_gen: v5e
topology: v5e:2x2
jax: 0.10.0
libtpu: 0.0.40
codegen_flags: <defaults>
</compile_context>

<pallas_src>
import functools

import jax
import jax.numpy as jnp
from jax.experimental import pallas as pl
from jax.experimental.pallas import tpu as pltpu


# ----------------------------- helpers --------------------------------------


def _gelu_tanh(x):
    c = 0.7978845608028654  # sqrt(2/pi)
    return 0.5 * x * (1.0 + jnp.tanh(c * (x + 0.044715 * x * x * x)))


def _pick_tile(dim, target, align):
    """Largest tile <= target that is a multiple of `align` and divides `dim`.

    Falls back to the full dim (always a legal block shape)."""
    if dim <= target:
        return dim
    t = (min(target, dim) // align) * align
    while t >= align:
        if dim % t == 0:
            return t
        t -= align
    return dim


# ----------------------------- Pallas kernels -------------------------------


def _linear_kernel(x_ref, w_ref, b_ref, o_ref, acc_ref, *, activation):
    k = pl.program_id(2)

    @pl.when(k == 0)
    def _():
        acc_ref[...] = jnp.zeros_like(acc_ref)

    acc_ref[...] += jnp.dot(x_ref[...], w_ref[...],
                            preferred_element_type=jnp.float32)

    @pl.when(k == pl.num_programs(2) - 1)
    def _():
        y = acc_ref[...] + b_ref[...]
        if activation == "gelu":
            y = _gelu_tanh(y)
        elif activation == "tanh":
            y = jnp.tanh(y)
        o_ref[...] = y.astype(o_ref.dtype)


def linear(x, w, b, activation="none", *, tm=256, tn=256, tk=512):
    """x: (M, K) @ w: (K, N) + b, optional activation. Tiled + K-accumulated."""
    M, K = x.shape
    N = w.shape[1]
    bm = _pick_tile(M, tm, 8)
    bn = _pick_tile(N, tn, 128)
    bk = _pick_tile(K, tk, 128)
    grid = (M // bm, N // bn, K // bk)
    n_trans = M * N if activation in ("gelu", "tanh") else 0
    return pl.pallas_call(
        functools.partial(_linear_kernel, activation=activation),
        out_shape=jax.ShapeDtypeStruct((M, N), x.dtype),
        grid=grid,
        in_specs=[
            pl.BlockSpec((bm, bk), lambda i, j, k: (i, k)),
            pl.BlockSpec((bk, bn), lambda i, j, k: (k, j)),
            pl.BlockSpec((1, bn), lambda i, j, k: (0, j)),
        ],
        out_specs=pl.BlockSpec((bm, bn), lambda i, j, k: (i, j)),
        scratch_shapes=[pltpu.VMEM((bm, bn), jnp.float32)],
        compiler_params=pltpu.CompilerParams(
            dimension_semantics=("parallel", "parallel", "arbitrary")),
        cost_estimate=pl.CostEstimate(
            flops=2 * M * N * K,
            transcendentals=n_trans,
            bytes_accessed=4 * (M * K + K * N + M * N)),
    )(x, w, b.reshape(1, N))


def _linear_addnorm_kernel(x_ref, w_ref, b_ref, r_ref, g_ref, bt_ref,
                           o_ref, acc_ref, *, eps):
    k = pl.program_id(1)

    @pl.when(k == 0)
    def _():
        acc_ref[...] = jnp.zeros_like(acc_ref)

    acc_ref[...] += jnp.dot(x_ref[...], w_ref[...],
                            preferred_element_type=jnp.float32)

    @pl.when(k == pl.num_programs(1) - 1)
    def _():
        # epilogue: bias + residual add + LayerNorm, all in f32.
        z = acc_ref[...] + b_ref[...] + r_ref[...].astype(jnp.float32)
        mean = jnp.mean(z, axis=-1, keepdims=True)
        var = jnp.mean((z - mean) ** 2, axis=-1, keepdims=True)
        zn = (z - mean) * jax.lax.rsqrt(var + eps)
        o_ref[...] = (zn * g_ref[...] + bt_ref[...]).astype(o_ref.dtype)


def linear_addnorm(x, w, b, residual, gamma, beta, eps=1e-5, *, tm=256, tk=512):
    """LayerNorm(residual + (x @ w + b)) fused into one kernel.

    N (= d_model) is kept whole per block because LayerNorm needs the full row;
    M and K are tiled."""
    M, K = x.shape
    N = w.shape[1]
    bm = _pick_tile(M, tm, 8)
    bk = _pick_tile(K, tk, 128)
    grid = (M // bm, K // bk)
    return pl.pallas_call(
        functools.partial(_linear_addnorm_kernel, eps=eps),
        out_shape=jax.ShapeDtypeStruct((M, N), x.dtype),
        grid=grid,
        in_specs=[
            pl.BlockSpec((bm, bk), lambda i, k: (i, k)),
            pl.BlockSpec((bk, N), lambda i, k: (k, 0)),
            pl.BlockSpec((1, N), lambda i, k: (0, 0)),
            pl.BlockSpec((bm, N), lambda i, k: (i, 0)),
            pl.BlockSpec((1, N), lambda i, k: (0, 0)),
            pl.BlockSpec((1, N), lambda i, k: (0, 0)),
        ],
        out_specs=pl.BlockSpec((bm, N), lambda i, k: (i, 0)),
        scratch_shapes=[pltpu.VMEM((bm, N), jnp.float32)],
        compiler_params=pltpu.CompilerParams(
            dimension_semantics=("parallel", "arbitrary")),
        cost_estimate=pl.CostEstimate(
            flops=2 * M * N * K + 10 * M * N,
            transcendentals=0,
            bytes_accessed=4 * (M * K + K * N + 3 * M * N)),
    )(x, w, b.reshape(1, N), residual, gamma.reshape(1, N), beta.reshape(1, N))


def _ffn_kernel(x_ref, w1_ref, b1_ref, w2_ref, b2_ref, o_ref, acc_ref):
    """Fused FFN: out = gelu(x @ w1 + b1) @ w2 + b2.

    The (bm, 4D) hidden slab lives only in VMEM (acc scratch)."""
    k = pl.program_id(1)

    @pl.when(k == 0)
    def _():
        acc_ref[...] = jnp.zeros_like(acc_ref)

    acc_ref[...] += jnp.dot(x_ref[...], w1_ref[...],
                            preferred_element_type=jnp.float32)

    @pl.when(k == pl.num_programs(1) - 1)
    def _():
        h = _gelu_tanh(acc_ref[...] + b1_ref[...])
        y = jnp.dot(h, w2_ref[...].astype(jnp.float32),
                    preferred_element_type=jnp.float32) + b2_ref[...]
        o_ref[...] = y.astype(o_ref.dtype)


def _ffn_vmem_estimate(bm, bk, H, D):
    f32 = 4
    dbl = 2  # double-buffered input/output blocks
    return f32 * (dbl * (bm * bk + bk * H + H + H * D + D + bm * D)
                  + bm * H)


def ffn(x, w1, b1, w2, b2, *, tm=256, tk=512):
    """Feed-forward block. Uses the fused kernel when it fits VMEM, otherwise
    falls back to two tiled linears (gelu fused into the first)."""
    M, K = x.shape
    H = w1.shape[1]
    D = w2.shape[1]
    bm = _pick_tile(M, tm, 8)
    bk = _pick_tile(K, tk, 128)
    if _ffn_vmem_estimate(bm, bk, H, D) > 16 * 1024 * 1024:
        h = linear(x, w1, b1, activation="gelu")
        return linear(h, w2, b2)
    grid = (M // bm, K // bk)
    return pl.pallas_call(
        _ffn_kernel,
        out_shape=jax.ShapeDtypeStruct((M, D), x.dtype),
        grid=grid,
        in_specs=[
            pl.BlockSpec((bm, bk), lambda i, k: (i, k)),
            pl.BlockSpec((bk, H), lambda i, k: (k, 0)),
            pl.BlockSpec((1, H), lambda i, k: (0, 0)),
            pl.BlockSpec((H, D), lambda i, k: (0, 0)),
            pl.BlockSpec((1, D), lambda i, k: (0, 0)),
        ],
        out_specs=pl.BlockSpec((bm, D), lambda i, k: (i, 0)),
        scratch_shapes=[pltpu.VMEM((bm, H), jnp.float32)],
        compiler_params=pltpu.CompilerParams(
            dimension_semantics=("parallel", "arbitrary")),
        cost_estimate=pl.CostEstimate(
            flops=2 * M * H * K + 2 * M * H * D,
            transcendentals=M * H,
            bytes_accessed=4 * (M * K + K * H + H * D + M * D)),
    )(x, w1, b1.reshape(1, H), w2, b2.reshape(1, D))


def _attention_kernel(qkv_ref, mask_ref, ctx_ref, p_ref, *,
                      n_head, d_head, scale):
    """One batch element per grid step; all heads computed in-kernel."""
    D = n_head * d_head
    qkv = qkv_ref[...].astype(jnp.float32)   # (S, 3D)
    is_pad = mask_ref[...] > 0               # (1, S) bool, True where key is <pad>
    neg = jnp.float32(-1e9)

    ctx_parts = []
    for h in range(n_head):                  # static unroll over heads
        qh = qkv[:, h * d_head:(h + 1) * d_head]
        kh = qkv[:, D + h * d_head:D + (h + 1) * d_head]
        vh = qkv[:, 2 * D + h * d_head:2 * D + (h + 1) * d_head]

        # QK^T without materializing a transpose: contract the last dims.
        s = jax.lax.dot_general(
            qh, kh, (((1,), (1,)), ((), ())),
            preferred_element_type=jnp.float32) * scale
        s = jnp.where(is_pad, neg, s)        # (1,S) broadcasts over queries

        mx = jnp.max(s, axis=-1, keepdims=True)
        e = jnp.exp(s - mx)
        inv = pl.reciprocal(jnp.sum(e, axis=-1, keepdims=True), approx=True)
        p = e * inv                          # softmax along keys
        p_ref[h] = p

        ctx_parts.append(jnp.dot(p, vh, preferred_element_type=jnp.float32))

    # lane-dense (S, D) write: heads merged by concatenation, no XLA transpose.
    ctx_ref[...] = jnp.concatenate(ctx_parts, axis=-1).astype(ctx_ref.dtype)


def attention(qkv, pad_mask, *, n_head, scale):
    """qkv: (B, S, 3D) fused projections; pad_mask: (B, 1, S) int32.

    Returns context (B, S, D) and attention probs (B, H, S, S)."""
    B, S, threeD = qkv.shape
    D = threeD // 3
    dh = D // n_head
    return pl.pallas_call(
        functools.partial(_attention_kernel, n_head=n_head, d_head=dh,
                          scale=scale),
        out_shape=(
            jax.ShapeDtypeStruct((B, S, D), qkv.dtype),
            jax.ShapeDtypeStruct((B, n_head, S, S), jnp.float32),
        ),
        grid=(B,),
        in_specs=[
            pl.BlockSpec((None, S, threeD), lambda b: (b, 0, 0)),
            pl.BlockSpec((None, 1, S), lambda b: (b, 0, 0)),
        ],
        out_specs=(
            pl.BlockSpec((None, S, D), lambda b: (b, 0, 0)),
            pl.BlockSpec((None, n_head, S, S), lambda b: (b, 0, 0, 0)),
        ),
        compiler_params=pltpu.CompilerParams(
            dimension_semantics=("parallel",)),
        cost_estimate=pl.CostEstimate(
            flops=4 * B * n_head * S * S * dh,
            transcendentals=B * n_head * S * S,
            bytes_accessed=4 * (B * S * threeD + B * S + B * S * D
                                + B * n_head * S * S)),
    )(qkv, pad_mask)


# ------------------------------ model glue ---------------------------------


def init_params(key, vocab_size, n_seg_type, n_head, d_model, seq_len_size):
    ks = jax.random.split(key, 12)
    s = 0.02

    def dense(k, fin, fout):
        return jax.random.normal(k, (fin, fout), jnp.float32) * s

    D = d_model
    return {
        "enc_emb": jax.random.normal(ks[0], (vocab_size, D), jnp.float32) * s,
        "pos_emb": jax.random.normal(ks[1], (seq_len_size + 1, D), jnp.float32) * s,
        "seg_emb": jax.random.normal(ks[2], (n_seg_type, D), jnp.float32) * s,
        "wq": dense(ks[3], D, D), "bq": jnp.zeros((D,), jnp.float32),
        "wk": dense(ks[4], D, D), "bk": jnp.zeros((D,), jnp.float32),
        "wv": dense(ks[5], D, D), "bv": jnp.zeros((D,), jnp.float32),
        "wo": dense(ks[6], D, D), "bo": jnp.zeros((D,), jnp.float32),
        "ln_g": jnp.ones((D,), jnp.float32),
        "ln_b": jnp.zeros((D,), jnp.float32),
        "w1": dense(ks[7], D, 4 * D), "b1": jnp.zeros((4 * D,), jnp.float32),
        "w2": dense(ks[8], 4 * D, D), "b2": jnp.zeros((D,), jnp.float32),
        "pool_w": dense(ks[9], D, D), "pool_b": jnp.zeros((D,), jnp.float32),
    }


def encoder_layer(params, wqkv, bqkv, x, pad_mask, n_head):
    B, S, D = x.shape
    dh = D // n_head
    x2 = x.reshape(B * S, D)

    # fused Q|K|V projection: one matmul, activations read from HBM once.
    qkv = linear(x2, wqkv, bqkv)                      # (B*S, 3D)
    qkv = qkv.reshape(B, S, 3 * D)

    scale = 1.0 / float(dh) ** 2  # reference quirk: / K.size(-1) ** 2
    ctx, probs = attention(qkv, pad_mask, n_head=n_head, scale=scale)

    # output projection + residual add + LayerNorm fused in one kernel.
    h1 = linear_addnorm(ctx.reshape(B * S, D), params["wo"], params["bo"],
                        x2, params["ln_g"], params["ln_b"])

    # fused FFN: Linear -> GELU -> Linear with hidden slab kept in VMEM.
    out = ffn(h1, params["w1"], params["b1"], params["w2"], params["b2"])
    return out.reshape(B, S, D), probs                # reference: no 2nd add&norm


def bert_forward(params, token_ids, segments, n_head, pad_id=0):
    B, S = token_ids.shape

    positions = jnp.broadcast_to(jnp.arange(S, dtype=jnp.int32) + 1, (B, S))
    positions = jnp.where(token_ids == pad_id, 0, positions)

    # TODO(synk): embedding gathers stay in XLA (no clean BlockSpec gather).
    x = (params["enc_emb"][token_ids]
         + params["pos_emb"][positions]
         + params["seg_emb"][segments])

    # tiny (B, 1, S) key-pad row; broadcast over queries inside the kernel.
    pad_mask = (token_ids == pad_id).astype(jnp.int32)[:, None, :]

    # fused QKV weights (built once per forward call).
    wqkv = jnp.concatenate([params["wq"], params["wk"], params["wv"]], axis=1)
    bqkv = jnp.concatenate([params["bq"], params["bk"], params["bv"]], axis=0)

    h = x
    soft_mats = []
    for _ in range(n_head):  # reference re-applies the same encoder layer n_head times
        h, probs = encoder_layer(params, wqkv, bqkv, h, pad_mask, n_head)
        soft_mats.append(probs)

    # pooler: tanh(Linear(outputs[:, 0]))
    cls = h[:, 0, :]
    pooled = linear(cls, params["pool_w"], params["pool_b"], activation="tanh")
    return h, pooled, soft_mats


# --------------------------------- main -------------------------------------


if __name__ == "__main__":
    vocab_size = 50
    n_seg_type = 2
    n_head = 4
    batch_size = 2
    d_model = 32
    seq_len_size = 8
    pad_id = 0

    key = jax.random.PRNGKey(0)
    kp, kt, ks = jax.random.split(key, 3)

    params = init_params(kp, vocab_size, n_seg_type, n_head, d_model, seq_len_size)

    token_ids = jax.random.randint(kt, (batch_size, seq_len_size), 1, vocab_size,
                                   dtype=jnp.int32)
    # force some padding at the tail of sequence 1
    token_ids = token_ids.at[1, -2:].set(pad_id)
    segments = jax.random.randint(ks, (batch_size, seq_len_size), 0, n_seg_type,
                                  dtype=jnp.int32)

    fwd = jax.jit(functools.partial(bert_forward, n_head=n_head, pad_id=pad_id))
    outputs, outputs_cls, attn_probs = fwd(params, token_ids, segments)
    jax.block_until_ready((outputs, outputs_cls, attn_probs))

    assert outputs.shape == (batch_size, seq_len_size, d_model)
    assert outputs_cls.shape == (batch_size, d_model)
    assert len(attn_probs) == n_head
    assert attn_probs[0].shape == (batch_size, n_head, seq_len_size, seq_len_size)
    assert bool(jnp.all(jnp.isfinite(outputs)))
    assert bool(jnp.all(jnp.isfinite(outputs_cls)))

    print("KERNEL_OK")
</pallas_src>

<mosaic_0001>
module attributes {stable_mosaic.version = 11 : i64} {
  func.func @_linear_addnorm_kernel(%arg0: i32, %arg1: i32, %arg2: memref<16x32xf32, #tpu.memory_space<vmem>>, %arg3: memref<32x32xf32, #tpu.memory_space<vmem>>, %arg4: memref<1x32xf32, #tpu.memory_space<vmem>>, %arg5: memref<16x32xf32, #tpu.memory_space<vmem>>, %arg6: memref<1x32xf32, #tpu.memory_space<vmem>>, %arg7: memref<1x32xf32, #tpu.memory_space<vmem>>, %arg8: memref<16x32xf32, #tpu.memory_space<vmem>>, %arg9: memref<16x32xf32, #tpu.memory_space<vmem>>) attributes {dimension_semantics = [#tpu.dimension_semantics<parallel>, #tpu.dimension_semantics<arbitrary>], iteration_bounds = array<i64: 1, 1>, scalar_prefetch = 0 : i64, scratch_operands = 1 : i64, tpu.core_type = #tpu.core_type<tc>, window_params = [{transform_indices = @transform_0, window_bounds = array<i64: 16, 32>}, {transform_indices = @transform_1, window_bounds = array<i64: 32, 32>}, {pipeline_mode = #tpu.pipeline_mode<synchronous>, transform_indices = @transform_2, window_bounds = array<i64: 1, 32>}, {transform_indices = @transform_3, window_bounds = array<i64: 16, 32>}, {pipeline_mode = #tpu.pipeline_mode<synchronous>, transform_indices = @transform_4, window_bounds = array<i64: 1, 32>}, {pipeline_mode = #tpu.pipeline_mode<synchronous>, transform_indices = @transform_5, window_bounds = array<i64: 1, 32>}, {transform_indices = @transform_6, window_bounds = array<i64: 16, 32>}]} {
    %c0_i32 = arith.constant 0 : i32
    %0 = arith.cmpi eq, %arg1, %c0_i32 : i32
    %1 = arith.extui %0 : i1 to i32
    %c0_i32_0 = arith.constant 0 : i32
    %2 = arith.cmpi ne, %1, %c0_i32_0 : i32
    scf.if %2 {
      %cst_10 = arith.constant 0.000000e+00 : f32
      %12 = vector.broadcast %cst_10 : f32 to vector<16x32xf32>
      %c0_11 = arith.constant 0 : index
      %c0_12 = arith.constant 0 : index
      %13 = vector.load %arg9[%c0_11, %c0_12] : memref<16x32xf32, #tpu.memory_space<vmem>>, vector<16x32xf32>
      tpu.vector_store %arg9[%c0_11, %c0_12], %12 {strides = array<i32>} : memref<16x32xf32, #tpu.memory_space<vmem>>, vector<16x32xf32>,
    } else {
    }
    %c0 = arith.constant 0 : index
    %c0_1 = arith.constant 0 : index
    %3 = vector.load %arg9[%c0, %c0_1] : memref<16x32xf32, #tpu.memory_space<vmem>>, vector<16x32xf32>
    %c0_2 = arith.constant 0 : index
    %c0_3 = arith.constant 0 : index
    %4 = vector.load %arg2[%c0_2, %c0_3] : memref<16x32xf32, #tpu.memory_space<vmem>>, vector<16x32xf32>
    %c0_4 = arith.constant 0 : index
    %c0_5 = arith.constant 0 : index
    %5 = vector.load %arg3[%c0_4, %c0_5] : memref<32x32xf32, #tpu.memory_space<vmem>>, vector<32x32xf32>
    %cst = arith.constant dense<0.000000e+00> : vector<16x32xf32>
    %6 = tpu.matmul %4, %5, %cst {dimension_numbers = #tpu.dot_dimension_numbers<[1], [0], [0], [1], [0, 0, 1, 1], [], []>} : vector<16x32xf32>, vector<32x32xf32>, vector<16x32xf32> -> vector<16x32xf32>
    %7 = arith.addf %3, %6 : vector<16x32xf32>
    %c0_6 = arith.constant 0 : index
    %c0_7 = arith.constant 0 : index
    %8 = vector.load %arg9[%c0_6, %c0_7] : memref<16x32xf32, #tpu.memory_space<vmem>>, vector<16x32xf32>
    tpu.vector_store %arg9[%c0_6, %c0_7], %7 {strides = array<i32>} : memref<16x32xf32, #tpu.memory_space<vmem>>, vector<16x32xf32>,
    %c0_i32_8 = arith.constant 0 : i32
    %9 = arith.cmpi eq, %arg1, %c0_i32_8 : i32
    %10 = arith.extui %9 : i1 to i32
    %c0_i32_9 = arith.constant 0 : i32
    %11 = arith.cmpi ne, %10, %c0_i32_9 : i32
    scf.if %11 {
      %c0_10 = arith.constant 0 : index
      %c0_11 = arith.constant 0 : index
      %12 = vector.load %arg9[%c0_10, %c0_11] : memref<16x32xf32, #tpu.memory_space<vmem>>, vector<16x32xf32>
      %c0_12 = arith.constant 0 : index
      %c0_13 = arith.constant 0 : index
      %13 = vector.load %arg4[%c0_12, %c0_13] : memref<1x32xf32, #tpu.memory_space<vmem>>, vector<1x32xf32>
      %14 = vector.broadcast %13 : vector<1x32xf32> to vector<16x32xf32>
      %15 = arith.addf %12, %14 : vector<16x32xf32>
      %c0_14 = arith.constant 0 : index
      %c0_15 = arith.constant 0 : index
      %16 = vector.load %arg5[%c0_14, %c0_15] : memref<16x32xf32, #tpu.memory_space<vmem>>, vector<16x32xf32>
      %17 = arith.addf %15, %16 : vector<16x32xf32>
      %cst_16 = arith.constant dense<0.000000e+00> : vector<16xf32>
      %18 = vector.multi_reduction <add>, %17, %cst_16 [1] : vector<16x32xf32> to vector<16xf32>
      %19 = vector.shape_cast %18 : vector<16xf32> to vector<16x1xf32>
      %cst_17 = arith.constant 3.200000e+01 : f32
      %20 = vector.broadcast %cst_17 : f32 to vector<16x1xf32>
      %21 = arith.divf %19, %20 : vector<16x1xf32>
      %22 = vector.broadcast %21 : vector<16x1xf32> to vector<16x32xf32>
      %23 = arith.subf %17, %22 : vector<16x32xf32>
      %24 = arith.mulf %23, %23 : vector<16x32xf32>
      %cst_18 = arith.constant dense<0.000000e+00> : vector<16xf32>
      %25 = vector.multi_reduction <add>, %24, %cst_18 [1] : vector<16x32xf32> to vector<16xf32>
      %26 = vector.shape_cast %25 : vector<16xf32> to vector<16x1xf32>
      %cst_19 = arith.constant 3.200000e+01 : f32
      %27 = vector.broadcast %cst_19 : f32 to vector<16x1xf32>
      %28 = arith.divf %26, %27 : vector<16x1xf32>
      %29 = vector.broadcast %21 : vector<16x1xf32> to vector<16x32xf32>
      %30 = arith.subf %17, %29 : vector<16x32xf32>
      %cst_20 = arith.constant 9.99999974E-6 : f32
      %31 = vector.broadcast %cst_20 : f32 to vector<16x1xf32>
      %32 = arith.addf %28, %31 : vector<16x1xf32>
      %33 = math.rsqrt %32 : vector<16x1xf32>
      %34 = vector.broadcast %33 : vector<16x1xf32> to vector<16x32xf32>
      %35 = arith.mulf %30, %34 : vector<16x32xf32>
      %c0_21 = arith.constant 0 : index
      %c0_22 = arith.constant 0 : index
      %36 = vector.load %arg6[%c0_21, %c0_22] : memref<1x32xf32, #tpu.memory_space<vmem>>, vector<1x32xf32>
      %37 = vector.broadcast %36 : vector<1x32xf32> to vector<16x32xf32>
      %38 = arith.mulf %35, %37 : vector<16x32xf32>
      %c0_23 = arith.constant 0 : index
      %c0_24 = arith.constant 0 : index
      %39 = vector.load %arg7[%c0_23, %c0_24] : memref<1x32xf32, #tpu.memory_space<vmem>>, vector<1x32xf32>
      %40 = vector.broadcast %39 : vector<1x32xf32> to vector<16x32xf32>
      %41 = arith.addf %38, %40 : vector<16x32xf32>
      %c0_25 = arith.constant 0 : index
      %c0_26 = arith.constant 0 : index
      %42 = vector.load %arg8[%c0_25, %c0_26] : memref<16x32xf32, #tpu.memory_space<vmem>>, vector<16x32xf32>
      tpu.vector_store %arg8[%c0_25, %c0_26], %41 {strides = array<i32>} : memref<16x32xf32, #tpu.memory_space<vmem>>, vector<16x32xf32>,
    } else {
    }
    return
  }
  func.func @transform_0(%arg0: i32, %arg1: i32) -> (i32, i32) {
    %c0_i32 = arith.constant 0 : i32
    return %arg0, %arg1 : i32, i32
  }
  func.func @transform_1(%arg0: i32, %arg1: i32) -> (i32, i32) {
    %c0_i32 = arith.constant 0 : i32
    %c0_i32_0 = arith.constant 0 : i32
    return %arg1, %c0_i32 : i32, i32
  }
  func.func @transform_2(%arg0: i32, %arg1: i32) -> (i32, i32) {
    %c0_i32 = arith.constant 0 : i32
    %c0_i32_0 = arith.constant 0 : i32
    %c0_i32_1 = arith.constant 0 : i32
    return %c0_i32, %c0_i32_0 : i32, i32
  }
  func.func @transform_3(%arg0: i32, %arg1: i32) -> (i32, i32) {
    %c0_i32 = arith.constant 0 : i32
    %c0_i32_0 = arith.constant 0 : i32
    return %arg0, %c0_i32 : i32, i32
  }
  func.func @transform_4(%arg0: i32, %arg1: i32) -> (i32, i32) {
    %c0_i32 = arith.constant 0 : i32
    %c0_i32_0 = arith.constant 0 : i32
    %c0_i32_1 = arith.constant 0 : i32
    return %c0_i32, %c0_i32_0 : i32, i32
  }
  func.func @transform_5(%arg0: i32, %arg1: i32) -> (i32, i32) {
    %c0_i32 = arith.constant 0 : i32
    %c0_i32_0 = arith.constant 0 : i32
    %c0_i32_1 = arith.constant 0 : i32
    return %c0_i32, %c0_i32_0 : i32, i32
  }
  func.func @transform_6(%arg0: i32, %arg1: i32) -> (i32, i32) {
    %c0_i32 = arith.constant 0 : i32
    %c0_i32_0 = arith.constant 0 : i32
    return %arg0, %c0_i32 : i32, i32
  }
}

module attributes {stable_mosaic.version = 11 : i64} {
  func.func @_linear_kernel(%arg0: i32, %arg1: i32, %arg2: i32, %arg3: memref<16x32xf32, #tpu.memory_space<vmem>>, %arg4: memref<32x96xf32, #tpu.memory_space<vmem>>, %arg5: memref<1x96xf32, #tpu.memory_space<vmem>>, %arg6: memref<16x96xf32, #tpu.memory_space<vmem>>, %arg7: memref<16x96xf32, #tpu.memory_space<vmem>>) attributes {dimension_semantics = [#tpu.dimension_semantics<parallel>, #tpu.dimension_semantics<parallel>, #tpu.dimension_semantics<arbitrary>], iteration_bounds = array<i64: 1, 1, 1>, scalar_prefetch = 0 : i64, scratch_operands = 1 : i64, tpu.core_type = #tpu.core_type<tc>, window_params = [{transform_indices = @transform_0, window_bounds = array<i64: 16, 32>}, {transform_indices = @transform_1, window_bounds = array<i64: 32, 96>}, {transform_indices = @transform_2, window_bounds = array<i64: 1, 96>}, {transform_indices = @transform_3, window_bounds = array<i64: 16, 96>}]} {
    %c0_i32 = arith.constant 0 : i32
    %0 = arith.cmpi eq, %arg2, %c0_i32 : i32
    %1 = arith.extui %0 : i1 to i32
    %c0_i32_0 = arith.constant 0 : i32
    %2 = arith.cmpi ne, %1, %c0_i32_0 : i32
    scf.if %2 {
      %cst_10 = arith.constant 0.000000e+00 : f32
      %12 = vector.broadcast %cst_10 : f32 to vector<16x96xf32>
      %c0_11 = arith.constant 0 : index
      %c0_12 = arith.constant 0 : index
      %13 = vector.load %arg7[%c0_11, %c0_12] : memref<16x96xf32, #tpu.memory_space<vmem>>, vector<16x96xf32>
      tpu.vector_store %arg7[%c0_11, %c0_12], %12 {strides = array<i32>} : memref<16x96xf32, #tpu.memory_space<vmem>>, vector<16x96xf32>,
    } else {
    }
    %c0 = arith.constant 0 : index
    %c0_1 = arith.constant 0 : index
    %3 = vector.load %arg7[%c0, %c0_1] : memref<16x96xf32, #tpu.memory_space<vmem>>, vector<16x96xf32>
    %c0_2 = arith.constant 0 : index
    %c0_3 = arith.constant 0 : index
    %4 = vector.load %arg3[%c0_2, %c0_3] : memref<16x32xf32, #tpu.memory_space<vmem>>, vector<16x32xf32>
    %c0_4 = arith.constant 0 : index
    %c0_5 = arith.constant 0 : index
    %5 = vector.load %arg4[%c0_4, %c0_5] : memref<32x96xf32, #tpu.memory_space<vmem>>, vector<32x96xf32>
    %cst = arith.constant dense<0.000000e+00> : vector<16x96xf32>
    %6 = tpu.matmul %4, %5, %cst {dimension_numbers = #tpu.dot_dimension_numbers<[1], [0], [0], [1], [0, 0, 1, 1], [], []>} : vector<16x32xf32>, vector<32x96xf32>, vector<16x96xf32> -> vector<16x96xf32>
    %7 = arith.addf %3, %6 : vector<16x96xf32>
    %c0_6 = arith.constant 0 : index
    %c0_7 = arith.constant 0 : index
    %8 = vector.load %arg7[%c0_6, %c0_7] : memref<16x96xf32, #tpu.memory_space<vmem>>, vector<16x96xf32>
    tpu.vector_store %arg7[%c0_6, %c0_7], %7 {strides = array<i32>} : memref<16x96xf32, #tpu.memory_space<vmem>>, vector<16x96xf32>,
    %c0_i32_8 = arith.constant 0 : i32
    %9 = arith.cmpi eq, %arg2, %c0_i32_8 : i32
    %10 = arith.extui %9 : i1 to i32
    %c0_i32_9 = arith.constant 0 : i32
    %11 = arith.cmpi ne, %10, %c0_i32_9 : i32
    scf.if %11 {
      %c0_10 = arith.constant 0 : index
      %c0_11 = arith.constant 0 : index
      %12 = vector.load %arg7[%c0_10, %c0_11] : memref<16x96xf32, #tpu.memory_space<vmem>>, vector<16x96xf32>
      %c0_12 = arith.constant 0 : index
      %c0_13 = arith.constant 0 : index
      %13 = vector.load %arg5[%c0_12, %c0_13] : memref<1x96xf32, #tpu.memory_space<vmem>>, vector<1x96xf32>
      %14 = vector.broadcast %13 : vector<1x96xf32> to vector<16x96xf32>
      %15 = arith.addf %12, %14 : vector<16x96xf32>
      %c0_14 = arith.constant 0 : index
      %c0_15 = arith.constant 0 : index
      %16 = vector.load %arg6[%c0_14, %c0_15] : memref<16x96xf32, #tpu.memory_space<vmem>>, vector<16x96xf32>
      tpu.vector_store %arg6[%c0_14, %c0_15], %15 {strides = array<i32>} : memref<16x96xf32, #tpu.memory_space<vmem>>, vector<16x96xf32>,
    } else {
    }
    return
  }
  func.func @transform_0(%arg0: i32, %arg1: i32, %arg2: i32) -> (i32, i32) {
    %c0_i32 = arith.constant 0 : i32
    return %arg0, %arg2 : i32, i32
  }
  func.func @transform_1(%arg0: i32, %arg1: i32, %arg2: i32) -> (i32, i32) {
    %c0_i32 = arith.constant 0 : i32
    return %arg2, %arg1 : i32, i32
  }
  func.func @transform_2(%arg0: i32, %arg1: i32, %arg2: i32) -> (i32, i32) {
    %c0_i32 = arith.constant 0 : i32
    %c0_i32_0 = arith.constant 0 : i32
    return %c0_i32, %arg1 : i32, i32
  }
  func.func @transform_3(%arg0: i32, %arg1: i32, %arg2: i32) -> (i32, i32) {
    %c0_i32 = arith.constant 0 : i32
    return %arg0, %arg1 : i32, i32
  }
}

module attributes {stable_mosaic.version = 11 : i64} {
  func.func @_attention_kernel(%arg0: i32, %arg1: memref<1x8x96xf32, #tpu.memory_space<vmem>>, %arg2: memref<1x1x8xi32, #tpu.memory_space<vmem>>, %arg3: memref<1x8x32xf32, #tpu.memory_space<vmem>>, %arg4: memref<1x4x8x8xf32, #tpu.memory_space<vmem>>) attributes {dimension_semantics = [#tpu.dimension_semantics<parallel>], iteration_bounds = array<i64: 2>, scalar_prefetch = 0 : i64, scratch_operands = 0 : i64, tpu.core_type = #tpu.core_type<tc>, window_params = [{transform_indices = @transform_0, window_bounds = array<i64: 1, 8, 96>}, {transform_indices = @transform_1, window_bounds = array<i64: 1, 1, 8>}, {transform_indices = @transform_2, window_bounds = array<i64: 1, 8, 32>}, {transform_indices = @transform_3, window_bounds = array<i64: 1, 4, 8, 8>}]} {
    %c0 = arith.constant 0 : index
    %c0_0 = arith.constant 0 : index
    %c0_1 = arith.constant 0 : index
    %0 = vector.load %arg1[%c0, %c0_0, %c0_1] : memref<1x8x96xf32, #tpu.memory_space<vmem>>, vector<1x8x96xf32>
    %1 = vector.shape_cast %0 : vector<1x8x96xf32> to vector<8x96xf32>
    %c0_2 = arith.constant 0 : index
    %c0_3 = arith.constant 0 : index
    %c0_4 = arith.constant 0 : index
    %2 = vector.load %arg2[%c0_2, %c0_3, %c0_4] : memref<1x1x8xi32, #tpu.memory_space<vmem>>, vector<1x1x8xi32>
    %3 = vector.shape_cast %2 : vector<1x1x8xi32> to vector<1x8xi32>
    %c0_i32 = arith.constant 0 : i32
    %4 = vector.broadcast %c0_i32 : i32 to vector<1x8xi32>
    %5 = arith.cmpi sgt, %3, %4 : vector<1x8xi32>
    %6 = vector.extract_strided_slice %1 {offsets = [0, 0], sizes = [8, 8], strides = [1, 1]} : vector<8x96xf32> to vector<8x8xf32>
    %7 = vector.extract_strided_slice %1 {offsets = [0, 32], sizes = [8, 8], strides = [1, 1]} : vector<8x96xf32> to vector<8x8xf32>
    %8 = vector.extract_strided_slice %1 {offsets = [0, 64], sizes = [8, 8], strides = [1, 1]} : vector<8x96xf32> to vector<8x8xf32>
    %cst = arith.constant dense<0.000000e+00> : vector<8x8xf32>
    %9 = tpu.matmul %6, %7, %cst {dimension_numbers = #tpu.dot_dimension_numbers<[1], [1], [0], [0], [0, 0, 1, 0], [], []>} : vector<8x8xf32>, vector<8x8xf32>, vector<8x8xf32> -> vector<8x8xf32>
    %cst_5 = arith.constant 1.562500e-02 : f32
    %10 = vector.broadcast %cst_5 : f32 to vector<8x8xf32>
    %11 = arith.mulf %9, %10 : vector<8x8xf32>
    %cst_6 = arith.constant -1.000000e+09 : f32
    %12 = vector.shape_cast %5 : vector<1x8xi1> to vector<1x8xi1>
    %13 = vector.broadcast %12 : vector<1x8xi1> to vector<8x8xi1>
    %14 = vector.broadcast %cst_6 : f32 to vector<8x8xf32>
    %15 = arith.select %13, %14, %11 : vector<8x8xi1>, vector<8x8xf32>
    %cst_7 = arith.constant dense<0xFF800000> : vector<8xf32>
    %16 = vector.multi_reduction <maximumf>, %15, %cst_7 [1] : vector<8x8xf32> to vector<8xf32>
    %17 = vector.shape_cast %16 : vector<8xf32> to vector<8x1xf32>
    %18 = vector.broadcast %17 : vector<8x1xf32> to vector<8x8xf32>
    %19 = arith.subf %15, %18 : vector<8x8xf32>
    %20 = math.exp %19 : vector<8x8xf32>
    %cst_8 = arith.constant dense<0.000000e+00> : vector<8xf32>
    %21 = vector.multi_reduction <add>, %20, %cst_8 [1] : vector<8x8xf32> to vector<8xf32>
    %22 = vector.shape_cast %21 : vector<8xf32> to vector<8x1xf32>
    %23 = tpu.reciprocal %22 {approx = true} : vector<8x1xf32> -> vector<8x1xf32>
    %24 = vector.broadcast %23 : vector<8x1xf32> to vector<8x8xf32>
    %25 = arith.mulf %20, %24 : vector<8x8xf32>
    %c0_9 = arith.constant 0 : index
    %c0_10 = arith.constant 0 : index
    %c0_11 = arith.constant 0 : index
    %c0_12 = arith.constant 0 : index
    %26 = vector.load %arg4[%c0_9, %c0_10, %c0_11, %c0_12] : memref<1x4x8x8xf32, #tpu.memory_space<vmem>>, vector<1x1x8x8xf32>
    %27 = vector.shape_cast %26 : vector<1x1x8x8xf32> to vector<8x8xf32>
    %28 = vector.shape_cast %25 : vector<8x8xf32> to vector<1x1x8x8xf32>
    tpu.vector_store %arg4[%c0_9, %c0_10, %c0_11, %c0_12], %28 {strides = array<i32>} : memref<1x4x8x8xf32, #tpu.memory_space<vmem>>, vector<1x1x8x8xf32>,
    %cst_13 = arith.constant dense<0.000000e+00> : vector<8x8xf32>
    %29 = tpu.matmul %25, %8, %cst_13 {dimension_numbers = #tpu.dot_dimension_numbers<[1], [0], [0], [1], [0, 0, 1, 1], [], []>} : vector<8x8xf32>, vector<8x8xf32>, vector<8x8xf32> -> vector<8x8xf32>
    %30 = vector.extract_strided_slice %1 {offsets = [0, 8], sizes = [8, 8], strides = [1, 1]} : vector<8x96xf32> to vector<8x8xf32>
    %31 = vector.extract_strided_slice %1 {offsets = [0, 40], sizes = [8, 8], strides = [1, 1]} : vector<8x96xf32> to vector<8x8xf32>
    %32 = vector.extract_strided_slice %1 {offsets = [0, 72], sizes = [8, 8], strides = [1, 1]} : vector<8x96xf32> to vector<8x8xf32>
    %cst_14 = arith.constant dense<0.000000e+00> : vector<8x8xf32>
    %33 = tpu.matmul %30, %31, %cst_14 {dimension_numbers = #tpu.dot_dimension_numbers<[1], [1], [0], [0], [0, 0, 1, 0], [], []>} : vector<8x8xf32>, vector<8x8xf32>, vector<8x8xf32> -> vector<8x8xf32>
    %cst_15 = arith.constant 1.562500e-02 : f32
    %34 = vector.broadcast %cst_15 : f32 to vector<8x8xf32>
    %35 = arith.mulf %33, %34 : vector<8x8xf32>
    %cst_16 = arith.constant -1.000000e+09 : f32
    %36 = vector.shape_cast %5 : vector<1x8xi1> to vector<1x8xi1>
    %37 = vector.broadcast %36 : vector<1x8xi1> to vector<8x8xi1>
    %38 = vector.broadcast %cst_16 : f32 to vector<8x8xf32>
    %39 = arith.select %37, %38, %35 : vector<8x8xi1>, vector<8x8xf32>
    %cst_17 = arith.constant dense<0xFF800000> : vector<8xf32>
    %40 = vector.multi_reduction <maximumf>, %39, %cst_17 [1] : vector<8x8xf32> to vector<8xf32>
    %41 = vector.shape_cast %40 : vector<8xf32> to vector<8x1xf32>
    %42 = vector.broadcast %41 : vector<8x1xf32> to vector<8x8xf32>
    %43 = arith.subf %39, %42 : vector<8x8xf32>
    %44 = math.exp %43 : vector<8x8xf32>
    %cst_18 = arith.constant dense<0.000000e+00> : vector<8xf32>
    %45 = vector.multi_reduction <add>, %44, %cst_18 [1] : vector<8x8xf32> to vector<8xf32>
    %46 = vector.shape_cast %45 : vector<8xf32> to vector<8x1xf32>
    %47 = tpu.reciprocal %46 {approx = true} : vector<8x1xf32> -> vector<8x1xf32>
    %48 = vector.broadcast %47 : vector<8x1xf32> to vector<8x8xf32>
    %49 = arith.mulf %44, %48 : vector<8x8xf32>
    %c0_19 = arith.constant 0 : index
    %c1 = arith.constant 1 : index
    %c0_20 = arith.constant 0 : index
    %c0_21 = arith.constant 0 : index
    %50 = vector.load %arg4[%c0_19, %c1, %c0_20, %c0_21] : memref<1x4x8x8xf32, #tpu.memory_space<vmem>>, vector<1x1x8x8xf32>
    %51 = vector.shape_cast %50 : vector<1x1x8x8xf32> to vector<8x8xf32>
    %52 = vector.shape_cast %49 : vector<8x8xf32> to vector<1x1x8x8xf32>
    tpu.vector_store %arg4[%c0_19, %c1, %c0_20, %c0_21], %52 {strides = array<i32>} : memref<1x4x8x8xf32, #tpu.memory_space<vmem>>, vector<1x1x8x8xf32>,
    %cst_22 = arith.constant dense<0.000000e+00> : vector<8x8xf32>
    %53 = tpu.matmul %49, %32, %cst_22 {dimension_numbers = #tpu.dot_dimension_numbers<[1], [0], [0], [1], [0, 0, 1, 1], [], []>} : vector<8x8xf32>, vector<8x8xf32>, vector<8x8xf32> -> vector<8x8xf32>
    %54 = vector.extract_strided_slice %1 {offsets = [0, 16], sizes = [8, 8], strides = [1, 1]} : vector<8x96xf32> to vector<8x8xf32>
    %55 = vector.extract_strided_slice %1 {offsets = [0, 48], sizes = [8, 8], strides = [1, 1]} : vector<8x96xf32> to vector<8x8xf32>
    %56 = vector.extract_strided_slice %1 {offsets = [0, 80], sizes = [8, 8], strides = [1, 1]} : vector<8x96xf32> to vector<8x8xf32>
    %cst_23 = arith.constant dense<0.000000e+00> : vector<8x8xf32>
    %57 = tpu.matmul %54, %55, %cst_23 {dimension_numbers = #tpu.dot_dimension_numbers<[1], [1], [0], [0], [0, 0, 1, 0], [], []>} : vector<8x8xf32>, vector<8x8xf32>, vector<8x8xf32> -> vector<8x8xf32>
    %cst_24 = arith.constant 1.562500e-02 : f32
    %58 = vector.broadcast %cst_24 : f32 to vector<8x8xf32>
    %59 = arith.mulf %57, %58 : vector<8x8xf32>
    %cst_25 = arith.constant -1.000000e+09 : f32
    %60 = vector.shape_cast %5 : vector<1x8xi1> to vector<1x8xi1>
    %61 = vector.broadcast %60 : vector<1x8xi1> to vector<8x8xi1>
    %62 = vector.broadcast %cst_25 : f32 to vector<8x8xf32>
    %63 = arith.select %61, %62, %59 : vector<8x8xi1>, vector<8x8xf32>
    %cst_26 = arith.constant dense<0xFF800000> : vector<8xf32>
    %64 = vector.multi_reduction <maximumf>, %63, %cst_26 [1] : vector<8x8xf32> to vector<8xf32>
    %65 = vector.shape_cast %64 : vector<8xf32> to vector<8x1xf32>
    %66 = vector.broadcast %65 : vector<8x1xf32> to vector<8x8xf32>
    %67 = arith.subf %63, %66 : vector<8x8xf32>
    %68 = math.exp %67 : vector<8x8xf32>
    %cst_27 = arith.constant dense<0.000000e+00> : vector<8xf32>
    %69 = vector.multi_reduction <add>, %68, %cst_27 [1] : vector<8x8xf32> to vector<8xf32>
    %70 = vector.shape_cast %69 : vector<8xf32> to vector<8x1xf32>
    %71 = tpu.reciprocal %70 {approx = true} : vector<8x1xf32> -> vector<8x1xf32>
    %72 = vector.broadcast %71 : vector<8x1xf32> to vector<8x8xf32>
    %73 = arith.mulf %68, %72 : vector<8x8xf32>
    %c0_28 = arith.constant 0 : index
    %c2 = arith.constant 2 : index
    %c0_29 = arith.constant 0 : index
    %c0_30 = arith.constant 0 : index
    %74 = vector.load %arg4[%c0_28, %c2, %c0_29, %c0_30] : memref<1x4x8x8xf32, #tpu.memory_space<vmem>>, vector<1x1x8x8xf32>
    %75 = vector.shape_cast %74 : vector<1x1x8x8xf32> to vector<8x8xf32>
    %76 = vector.shape_cast %73 : vector<8x8xf32> to vector<1x1x8x8xf32>
    tpu.vector_store %arg4[%c0_28, %c2, %c0_29, %c0_30], %76 {strides = array<i32>} : memref<1x4x8x8xf32, #tpu.memory_space<vmem>>, vector<1x1x8x8xf32>,
    %cst_31 = arith.constant dense<0.000000e+00> : vector<8x8xf32>
    %77 = tpu.matmul %73, %56, %cst_31 {dimension_numbers = #tpu.dot_dimension_numbers<[1], [0], [0], [1], [0, 0, 1, 1], [], []>} : vector<8x8xf32>, vector<8x8xf32>, vector<8x8xf32> -> vector<8x8xf32>
    %78 = vector.extract_strided_slice %1 {offsets = [0, 24], sizes = [8, 8], strides = [1, 1]} : vector<8x96xf32> to vector<8x8xf32>
    %79 = vector.extract_strided_slice %1 {offsets = [0, 56], sizes = [8, 8], strides = [1, 1]} : vector<8x96xf32> to vector<8x8xf32>
    %80 = vector.extract_strided_slice %1 {offsets = [0, 88], sizes = [8, 8], strides = [1, 1]} : vector<8x96xf32> to vector<8x8xf32>
    %cst_32 = arith.constant dense<0.000000e+00> : vector<8x8xf32>
    %81 = tpu.matmul %78, %79, %cst_32 {dimension_numbers = #tpu.dot_dimension_numbers<[1], [1], [0], [0], [0, 0, 1, 0], [], []>} : vector<8x8xf32>, vector<8x8xf32>, vector<8x8xf32> -> vector<8x8xf32>
    %cst_33 = arith.constant 1.562500e-02 : f32
    %82 = vector.broadcast %cst_33 : f32 to vector<8x8xf32>
    %83 = arith.mulf %81, %82 : vector<8x8xf32>
    %cst_34 = arith.constant -1.000000e+09 : f32
    %84 = vector.shape_cast %5 : vector<1x8xi1> to vector<1x8xi1>
    %85 = vector.broadcast %84 : vector<1x8xi1> to vector<8x8xi1>
    %86 = vector.broadcast %cst_34 : f32 to vector<8x8xf32>
    %87 = arith.select %85, %86, %83 : vector<8x8xi1>, vector<8x8xf32>
    %cst_35 = arith.constant dense<0xFF800000> : vector<8xf32>
    %88 = vector.multi_reduction <maximumf>, %87, %cst_35 [1] : vector<8x8xf32> to vector<8xf32>
    %89 = vector.shape_cast %88 : vector<8xf32> to vector<8x1xf32>
    %90 = vector.broadcast %89 : vector<8x1xf32> to vector<8x8xf32>
    %91 = arith.subf %87, %90 : vector<8x8xf32>
    %92 = math.exp %91 : vector<8x8xf32>
    %cst_36 = arith.constant dense<0.000000e+00> : vector<8xf32>
    %93 = vector.multi_reduction <add>, %92, %cst_36 [1] : vector<8x8xf32> to vector<8xf32>
    %94 = vector.shape_cast %93 : vector<8xf32> to vector<8x1xf32>
    %95 = tpu.reciprocal %94 {approx = true} : vector<8x1xf32> -> vector<8x1xf32>
    %96 = vector.broadcast %95 : vector<8x1xf32> to vector<8x8xf32>
    %97 = arith.mulf %92, %96 : vector<8x8xf32>
    %c0_37 = arith.constant 0 : index
    %c3 = arith.constant 3 : index
    %c0_38 = arith.constant 0 : index
    %c0_39 = arith.constant 0 : index
    %98 = vector.load %arg4[%c0_37, %c3, %c0_38, %c0_39] : memref<1x4x8x8xf32, #tpu.memory_space<vmem>>, vector<1x1x8x8xf32>
    %99 = vector.shape_cast %98 : vector<1x1x8x8xf32> to vector<8x8xf32>
    %100 = vector.shape_cast %97 : vector<8x8xf32> to vector<1x1x8x8xf32>
    tpu.vector_store %arg4[%c0_37, %c3, %c0_38, %c0_39], %100 {strides = array<i32>} : memref<1x4x8x8xf32, #tpu.memory_space<vmem>>, vector<1x1x8x8xf32>,
    %cst_40 = arith.constant dense<0.000000e+00> : vector<8x8xf32>
    %101 = tpu.matmul %97, %80, %cst_40 {dimension_numbers = #tpu.dot_dimension_numbers<[1], [0], [0], [1], [0, 0, 1, 1], [], []>} : vector<8x8xf32>, vector<8x8xf32>, vector<8x8xf32> -> vector<8x8xf32>
    %102 = tpu.concatenate %29, %53, %77, %101 in 1 : vector<8x8xf32>, vector<8x8xf32>, vector<8x8xf32>, vector<8x8xf32> -> vector<8x32xf32>
    %c0_41 = arith.constant 0 : index
    %c0_42 = arith.constant 0 : index
    %c0_43 = arith.constant 0 : index
    %103 = vector.load %arg3[%c0_41, %c0_42, %c0_43] : memref<1x8x32xf32, #tpu.memory_space<vmem>>, vector<1x8x32xf32>
    %104 = vector.shape_cast %103 : vector<1x8x32xf32> to vector<8x32xf32>
    %105 = vector.shape_cast %102 : vector<8x32xf32> to vector<1x8x32xf32>
    tpu.vector_store %arg3[%c0_41, %c0_42, %c0_43], %105 {strides = array<i32>} : memref<1x8x32xf32, #tpu.memory_space<vmem>>, vector<1x8x32xf32>,
    return
  }
  func.func @transform_0(%arg0: i32) -> (i32, i32, i32) {
    %c0_i32 = arith.constant 0 : i32
    %c0_i32_0 = arith.constant 0 : i32
    %c0_i32_1 = arith.constant 0 : i32
    return %arg0, %c0_i32, %c0_i32_0 : i32, i32, i32
  }
  func.func @transform_1(%arg0: i32) -> (i32, i32, i32) {
    %c0_i32 = arith.constant 0 : i32
    %c0_i32_0 = arith.constant 0 : i32
    %c0_i32_1 = arith.constant 0 : i32
    return %arg0, %c0_i32, %c0_i32_0 : i32, i32, i32
  }
  func.func @transform_2(%arg0: i32) -> (i32, i32, i32) {
    %c0_i32 = arith.constant 0 : i32
    %c0_i32_0 = arith.constant 0 : i32
    %c0_i32_1 = arith.constant 0 : i32
    return %arg0, %c0_i32, %c0_i32_0 : i32, i32, i32
  }
  func.func @transform_3(%arg0: i32) -> (i32, i32, i32, i32) {
    %c0_i32 = arith.constant 0 : i32
    %c0_i32_0 = arith.constant 0 : i32
    %c0_i32_1 = arith.constant 0 : i32
    %c0_i32_2 = arith.constant 0 : i32
    return %arg0, %c0_i32, %c0_i32_0, %c0_i32_1 : i32, i32, i32, i32
  }
}

module attributes {stable_mosaic.version = 11 : i64} {
  func.func @_ffn_kernel(%arg0: i32, %arg1: i32, %arg2: memref<16x32xf32, #tpu.memory_space<vmem>>, %arg3: memref<32x128xf32, #tpu.memory_space<vmem>>, %arg4: memref<1x128xf32, #tpu.memory_space<vmem>>, %arg5: memref<128x32xf32, #tpu.memory_space<vmem>>, %arg6: memref<1x32xf32, #tpu.memory_space<vmem>>, %arg7: memref<16x32xf32, #tpu.memory_space<vmem>>, %arg8: memref<16x128xf32, #tpu.memory_space<vmem>>) attributes {dimension_semantics = [#tpu.dimension_semantics<parallel>, #tpu.dimension_semantics<arbitrary>], iteration_bounds = array<i64: 1, 1>, scalar_prefetch = 0 : i64, scratch_operands = 1 : i64, tpu.core_type = #tpu.core_type<tc>, window_params = [{transform_indices = @transform_0, window_bounds = array<i64: 16, 32>}, {transform_indices = @transform_1, window_bounds = array<i64: 32, 128>}, {pipeline_mode = #tpu.pipeline_mode<synchronous>, transform_indices = @transform_2, window_bounds = array<i64: 1, 128>}, {pipeline_mode = #tpu.pipeline_mode<synchronous>, transform_indices = @transform_3, window_bounds = array<i64: 128, 32>}, {pipeline_mode = #tpu.pipeline_mode<synchronous>, transform_indices = @transform_4, window_bounds = array<i64: 1, 32>}, {transform_indices = @transform_5, window_bounds = array<i64: 16, 32>}]} {
    %c0_i32 = arith.constant 0 : i32
    %0 = arith.cmpi eq, %arg1, %c0_i32 : i32
    %1 = arith.extui %0 : i1 to i32
    %c0_i32_0 = arith.constant 0 : i32
    %2 = arith.cmpi ne, %1, %c0_i32_0 : i32
    scf.if %2 {
      %cst_10 = arith.constant 0.000000e+00 : f32
      %12 = vector.broadcast %cst_10 : f32 to vector<16x128xf32>
      %c0_11 = arith.constant 0 : index
      %c0_12 = arith.constant 0 : index
      %13 = vector.load %arg8[%c0_11, %c0_12] : memref<16x128xf32, #tpu.memory_space<vmem>>, vector<16x128xf32>
      tpu.vector_store %arg8[%c0_11, %c0_12], %12 {strides = array<i32>} : memref<16x128xf32, #tpu.memory_space<vmem>>, vector<16x128xf32>,
    } else {
    }
    %c0 = arith.constant 0 : index
    %c0_1 = arith.constant 0 : index
    %3 = vector.load %arg8[%c0, %c0_1] : memref<16x128xf32, #tpu.memory_space<vmem>>, vector<16x128xf32>
    %c0_2 = arith.constant 0 : index
    %c0_3 = arith.constant 0 : index
    %4 = vector.load %arg2[%c0_2, %c0_3] : memref<16x32xf32, #tpu.memory_space<vmem>>, vector<16x32xf32>
    %c0_4 = arith.constant 0 : index
    %c0_5 = arith.constant 0 : index
    %5 = vector.load %arg3[%c0_4, %c0_5] : memref<32x128xf32, #tpu.memory_space<vmem>>, vector<32x128xf32>
    %cst = arith.constant dense<0.000000e+00> : vector<16x128xf32>
    %6 = tpu.matmul %4, %5, %cst {dimension_numbers = #tpu.dot_dimension_numbers<[1], [0], [0], [1], [0, 0, 1, 1], [], []>} : vector<16x32xf32>, vector<32x128xf32>, vector<16x128xf32> -> vector<16x128xf32>
    %7 = arith.addf %3, %6 : vector<16x128xf32>
    %c0_6 = arith.constant 0 : index
    %c0_7 = arith.constant 0 : index
    %8 = vector.load %arg8[%c0_6, %c0_7] : memref<16x128xf32, #tpu.memory_space<vmem>>, vector<16x128xf32>
    tpu.vector_store %arg8[%c0_6, %c0_7], %7 {strides = array<i32>} : memref<16x128xf32, #tpu.memory_space<vmem>>, vector<16x128xf32>,
    %c0_i32_8 = arith.constant 0 : i32
    %9 = arith.cmpi eq, %arg1, %c0_i32_8 : i32
    %10 = arith.extui %9 : i1 to i32
    %c0_i32_9 = arith.constant 0 : i32
    %11 = arith.cmpi ne, %10, %c0_i32_9 : i32
    scf.if %11 {
      %c0_10 = arith.constant 0 : index
      %c0_11 = arith.constant 0 : index
      %12 = vector.load %arg8[%c0_10, %c0_11] : memref<16x128xf32, #tpu.memory_space<vmem>>, vector<16x128xf32>
      %c0_12 = arith.constant 0 : index
      %c0_13 = arith.constant 0 : index
      %13 = vector.load %arg4[%c0_12, %c0_13] : memref<1x128xf32, #tpu.memory_space<vmem>>, vector<1x128xf32>
      %14 = vector.broadcast %13 : vector<1x128xf32> to vector<16x128xf32>
      %15 = arith.addf %12, %14 : vector<16x128xf32>
      %cst_14 = arith.constant 5.000000e-01 : f32
      %16 = vector.broadcast %cst_14 : f32 to vector<16x128xf32>
      %17 = arith.mulf %16, %15 : vector<16x128xf32>
      %cst_15 = arith.constant 4.471500e-02 : f32
      %18 = vector.broadcast %cst_15 : f32 to vector<16x128xf32>
      %19 = arith.mulf %18, %15 : vector<16x128xf32>
      %20 = arith.mulf %19, %15 : vector<16x128xf32>
      %21 = arith.mulf %20, %15 : vector<16x128xf32>
      %22 = arith.addf %15, %21 : vector<16x128xf32>
      %cst_16 = arith.constant 0.797884583 : f32
      %23 = vector.broadcast %cst_16 : f32 to vector<16x128xf32>
      %24 = arith.mulf %23, %22 : vector<16x128xf32>
      %25 = math.tanh %24 : vector<16x128xf32>
      %cst_17 = arith.constant 1.000000e+00 : f32
      %26 = vector.broadcast %cst_17 : f32 to vector<16x128xf32>
      %27 = arith.addf %26, %25 : vector<16x128xf32>
      %28 = arith.mulf %17, %27 : vector<16x128xf32>
      %c0_18 = arith.constant 0 : index
      %c0_19 = arith.constant 0 : index
      %29 = vector.load %arg5[%c0_18, %c0_19] : memref<128x32xf32, #tpu.memory_space<vmem>>, vector<128x32xf32>
      %cst_20 = arith.constant dense<0.000000e+00> : vector<16x32xf32>
      %30 = tpu.matmul %28, %29, %cst_20 {dimension_numbers = #tpu.dot_dimension_numbers<[1], [0], [0], [1], [0, 0, 1, 1], [], []>} : vector<16x128xf32>, vector<128x32xf32>, vector<16x32xf32> -> vector<16x32xf32>
      %c0_21 = arith.constant 0 : index
      %c0_22 = arith.constant 0 : index
      %31 = vector.load %arg6[%c0_21, %c0_22] : memref<1x32xf32, #tpu.memory_space<vmem>>, vector<1x32xf32>
      %32 = vector.broadcast %31 : vector<1x32xf32> to vector<16x32xf32>
      %33 = arith.addf %30, %32 : vector<16x32xf32>
      %c0_23 = arith.constant 0 : index
      %c0_24 = arith.constant 0 : index
      %34 = vector.load %arg7[%c0_23, %c0_24] : memref<16x32xf32, #tpu.memory_space<vmem>>, vector<16x32xf32>
      tpu.vector_store %arg7[%c0_23, %c0_24], %33 {strides = array<i32>} : memref<16x32xf32, #tpu.memory_space<vmem>>, vector<16x32xf32>,
    } else {
    }
    return
  }
  func.func @transform_0(%arg0: i32, %arg1: i32) -> (i32, i32) {
    %c0_i32 = arith.constant 0 : i32
    return %arg0, %arg1 : i32, i32
  }
  func.func @transform_1(%arg0: i32, %arg1: i32) -> (i32, i32) {
    %c0_i32 = arith.constant 0 : i32
    %c0_i32_0 = arith.constant 0 : i32
    return %arg1, %c0_i32 : i32, i32
  }
  func.func @transform_2(%arg0: i32, %arg1: i32) -> (i32, i32) {
    %c0_i32 = arith.constant 0 : i32
    %c0_i32_0 = arith.constant 0 : i32
    %c0_i32_1 = arith.constant 0 : i32
    return %c0_i32, %c0_i32_0 : i32, i32
  }
  func.func @transform_3(%arg0: i32, %arg1: i32) -> (i32, i32) {
    %c0_i32 = arith.constant 0 : i32
    %c0_i32_0 = arith.constant 0 : i32
    %c0_i32_1 = arith.constant 0 : i32
    return %c0_i32, %c0_i32_0 : i32, i32
  }
  func.func @transform_4(%arg0: i32, %arg1: i32) -> (i32, i32) {
    %c0_i32 = arith.constant 0 : i32
    %c0_i32_0 = arith.constant 0 : i32
    %c0_i32_1 = arith.constant 0 : i32
    return %c0_i32, %c0_i32_0 : i32, i32
  }
  func.func @transform_5(%arg0: i32, %arg1: i32) -> (i32, i32) {
    %c0_i32 = arith.constant 0 : i32
    %c0_i32_0 = arith.constant 0 : i32
    return %arg0, %c0_i32 : i32, i32
  }
}

module attributes {stable_mosaic.version = 11 : i64} {
  func.func @_linear_kernel(%arg0: i32, %arg1: i32, %arg2: i32, %arg3: memref<2x32xf32, #tpu.memory_space<vmem>>, %arg4: memref<32x32xf32, #tpu.memory_space<vmem>>, %arg5: memref<1x32xf32, #tpu.memory_space<vmem>>, %arg6: memref<2x32xf32, #tpu.memory_space<vmem>>, %arg7: memref<2x32xf32, #tpu.memory_space<vmem>>) attributes {dimension_semantics = [#tpu.dimension_semantics<parallel>, #tpu.dimension_semantics<parallel>, #tpu.dimension_semantics<arbitrary>], iteration_bounds = array<i64: 1, 1, 1>, scalar_prefetch = 0 : i64, scratch_operands = 1 : i64, tpu.core_type = #tpu.core_type<tc>, window_params = [{transform_indices = @transform_0, window_bounds = array<i64: 2, 32>}, {transform_indices = @transform_1, window_bounds = array<i64: 32, 32>}, {transform_indices = @transform_2, window_bounds = array<i64: 1, 32>}, {transform_indices = @transform_3, window_bounds = array<i64: 2, 32>}]} {
    %c0_i32 = arith.constant 0 : i32
    %0 = arith.cmpi eq, %arg2, %c0_i32 : i32
    %1 = arith.extui %0 : i1 to i32
    %c0_i32_0 = arith.constant 0 : i32
    %2 = arith.cmpi ne, %1, %c0_i32_0 : i32
    scf.if %2 {
      %cst_10 = arith.constant 0.000000e+00 : f32
      %12 = vector.broadcast %cst_10 : f32 to vector<2x32xf32>
      %c0_11 = arith.constant 0 : index
      %c0_12 = arith.constant 0 : index
      %13 = vector.load %arg7[%c0_11, %c0_12] : memref<2x32xf32, #tpu.memory_space<vmem>>, vector<2x32xf32>
      tpu.vector_store %arg7[%c0_11, %c0_12], %12 {strides = array<i32>} : memref<2x32xf32, #tpu.memory_space<vmem>>, vector<2x32xf32>,
    } else {
    }
    %c0 = arith.constant 0 : index
    %c0_1 = arith.constant 0 : index
    %3 = vector.load %arg7[%c0, %c0_1] : memref<2x32xf32, #tpu.memory_space<vmem>>, vector<2x32xf32>
    %c0_2 = arith.constant 0 : index
    %c0_3 = arith.constant 0 : index
    %4 = vector.load %arg3[%c0_2, %c0_3] : memref<2x32xf32, #tpu.memory_space<vmem>>, vector<2x32xf32>
    %c0_4 = arith.constant 0 : index
    %c0_5 = arith.constant 0 : index
    %5 = vector.load %arg4[%c0_4, %c0_5] : memref<32x32xf32, #tpu.memory_space<vmem>>, vector<32x32xf32>
    %cst = arith.constant dense<0.000000e+00> : vector<2x32xf32>
    %6 = tpu.matmul %4, %5, %cst {dimension_numbers = #tpu.dot_dimension_numbers<[1], [0], [0], [1], [0, 0, 1, 1], [], []>} : vector<2x32xf32>, vector<32x32xf32>, vector<2x32xf32> -> vector<2x32xf32>
    %7 = arith.addf %3, %6 : vector<2x32xf32>
    %c0_6 = arith.constant 0 : index
    %c0_7 = arith.constant 0 : index
    %8 = vector.load %arg7[%c0_6, %c0_7] : memref<2x32xf32, #tpu.memory_space<vmem>>, vector<2x32xf32>
    tpu.vector_store %arg7[%c0_6, %c0_7], %7 {strides = array<i32>} : memref<2x32xf32, #tpu.memory_space<vmem>>, vector<2x32xf32>,
    %c0_i32_8 = arith.constant 0 : i32
    %9 = arith.cmpi eq, %arg2, %c0_i32_8 : i32
    %10 = arith.extui %9 : i1 to i32
    %c0_i32_9 = arith.constant 0 : i32
    %11 = arith.cmpi ne, %10, %c0_i32_9 : i32
    scf.if %11 {
      %c0_10 = arith.constant 0 : index
      %c0_11 = arith.constant 0 : index
      %12 = vector.load %arg7[%c0_10, %c0_11] : memref<2x32xf32, #tpu.memory_space<vmem>>, vector<2x32xf32>
      %c0_12 = arith.constant 0 : index
      %c0_13 = arith.constant 0 : index
      %13 = vector.load %arg5[%c0_12, %c0_13] : memref<1x32xf32, #tpu.memory_space<vmem>>, vector<1x32xf32>
      %14 = vector.broadcast %13 : vector<1x32xf32> to vector<2x32xf32>
      %15 = arith.addf %12, %14 : vector<2x32xf32>
      %16 = math.tanh %15 : vector<2x32xf32>
      %c0_14 = arith.constant 0 : index
      %c0_15 = arith.constant 0 : index
      %17 = vector.load %arg6[%c0_14, %c0_15] : memref<2x32xf32, #tpu.memory_space<vmem>>, vector<2x32xf32>
      tpu.vector_store %arg6[%c0_14, %c0_15], %16 {strides = array<i32>} : memref<2x32xf32, #tpu.memory_space<vmem>>, vector<2x32xf32>,
    } else {
    }
    return
  }
  func.func @transform_0(%arg0: i32, %arg1: i32, %arg2: i32) -> (i32, i32) {
    %c0_i32 = arith.constant 0 : i32
    return %arg0, %arg2 : i32, i32
  }
  func.func @transform_1(%arg0: i32, %arg1: i32, %arg2: i32) -> (i32, i32) {
    %c0_i32 = arith.constant 0 : i32
    return %arg2, %arg1 : i32, i32
  }
  func.func @transform_2(%arg0: i32, %arg1: i32, %arg2: i32) -> (i32, i32) {
    %c0_i32 = arith.constant 0 : i32
    %c0_i32_0 = arith.constant 0 : i32
    return %c0_i32, %arg1 : i32, i32
  }
  func.func @transform_3(%arg0: i32, %arg1: i32, %arg2: i32) -> (i32, i32) {
    %c0_i32 = arith.constant 0 : i32
    return %arg0, %arg1 : i32, i32
  }
}

</mosaic_0001>

<llo_original>
// kernel: bert_forward.17
$region0: #{bert_forward.17}
  #allocation0 [shape = 'u32[]', space=smem, size = 0x4, offset = 0x4, fixed_abs, tag = 'smem constant byte address 0x4 - core index']
  #allocation1 [shape = 'u32[72,128]{1,0:T(1,128)}', space=vmem, size = 0x9000, scoped, tag = 'internal scratch']
  #allocation2 [shape = 'f32[16,96]{1,0:T(8,128)}', space=vmem, size = 0x2000, scoped, tag = 'scratch operand']
  %s0 = inlined_call_operand.vmem [shape: f32[16,32], index: 0, kind: input, shape index: {}]
  %s1 = inlined_call_operand.vmem [shape: f32[32,96], index: 1, kind: input, shape index: {}]
  %s2 = inlined_call_operand.vmem [shape: f32[1,96], index: 2, kind: input, shape index: {}]
  %s3 = inlined_call_operand.vmem [shape: f32[16,96], index: 3, kind: output, shape index: {}]
  %s4 = sld [smem:[#allocation0]]
  $region30: #{bert_forward.17} parent=0
    _
  %s6 = ssub.s32 1, %s4
  %s7 = scalar_select 0, %s6, %s4
  // Predicated region
  $region2: #{bert_forward.17} parent=0 // pred_check
    _
  $region3: #{bert_forward.17} parent=0 // pred_check_branch
    %9 = sbr.rel (0) target = $region5
  $region4: #{bert_forward.17} parent=0 // pred_region
    _
  $region5: #{bert_forward.17} parent=0 // pred_fallthru
    _
  // Predicated region
  $region6: #{bert_forward.17} parent=0 // pred_check
    _
  $region7: #{bert_forward.17} parent=0 // pred_check_branch
    %11 = sbr.rel (0) target = $region9
  $region8: #{bert_forward.17} parent=0 // pred_region
    _
  $region9: #{bert_forward.17} parent=0 // pred_fallthru
    _
  // Predicated region
  $region10: #{bert_forward.17} parent=0 // pred_check
    _
  $region11: #{bert_forward.17} parent=0 // pred_check_branch
    %13 = sbr.rel (0) target = $region13
  $region12: #{bert_forward.17} parent=0 // pred_region
    _
  $region13: #{bert_forward.17} parent=0 // pred_fallthru
    _
  %p14 = scmp.eq.s32.totalorder 0, 0
  // Predicated region
  $region14: #{bert_forward.17} parent=0 // pred_check
    %p15 = pneg %p14
  $region15: #{bert_forward.17} parent=0 // pred_check_branch
    %17 = sbr.rel (%p15) target = $region17
  $region16: #{bert_forward.17} parent=0 // pred_region
    %vm18 = vcmask 785408
    %19 = vst.msk [vmem:[#allocation2] sm:$0xff] %vm18, 0.0
    %20 = vst.msk [vmem:[#allocation2 + $0x8] sm:$0xff] %vm18, 0.0
  $region17: #{bert_forward.17} parent=0 // pred_fallthru
    _
  %v21 = vld [vmem:[#allocation2] sm:$0xff]
  %v22 = vld [vmem:[#allocation2 + $0x8] sm:$0xff]
  %v23 = vld [vmem:[%s0] sm:$0xff]
  %v24 = vld [vmem:[%s0 + $0x8] sm:$0xff]
  %v25 = vld [vmem:[%s1] sm:$0xff]
  %v26 = vld [vmem:[%s1 + $0x8] sm:$0xff]
  %v27 = vld [vmem:[%s1 + $0x10] sm:$0xff]
  %v28 = vld [vmem:[%s1 + $0x18] sm:$0xff]
  %vm29 = vcmask 261120
  %v31 = vsel %vm29, %v23, 0
  %v34 = vsel %vm29, %v24, 0
  %36 = vmatpush.msra.mxu0 0.0
  %37 = vmatpush.msra.mxu0 0.0
  %38 = vmatpush.msra.mxu0 0.0
  %39 = vmatpush.msra.mxu0 0.0
  %40 = vmatpush.msra.mxu0 0.0
  %41 = vmatpush.msra.mxu0 0.0
  %42 = vmatpush.msra.mxu0 0.0
  %43 = vmatpush.msra.mxu0 0.0
  %44 = vmatpush.msra.mxu0 0.0
  %45 = vmatpush.msra.mxu0 0.0
  %46 = vmatpush.msra.mxu0 0.0
  %47 = vmatpush.msra.mxu0 0.0
  %48 = vmatpush.msra.mxu0 %v28
  %49 = vmatpush.msra.mxu0 %v27
  %50 = vmatpush.msra.mxu0 %v26
  %51 = vmatpush.msra.mxu0 %v25
  %52 = vmatmul.f32.gmra.mxu0 %v31
  %v53 = vpop.f32.mrf.mxu0
  %v54 = vadd.f32 0.0, %v53
  %55 = vmatmul.f32.gmra.mxu0 %v34
  %v56 = vpop.f32.mrf.mxu0
  %v57 = vadd.f32 0.0, %v56
  %58 = vdwg.mxu0
  %v59 = vadd.f32 %v21, %v54
  %v60 = vadd.f32 %v22, %v57
  %vm61 = vcmask 785408
  %62 = vst.msk [vmem:[#allocation2] sm:$0xff] %vm61, %v59
  %63 = vst.msk [vmem:[#allocation2 + $0x8] sm:$0xff] %vm61, %v60
  // Predicated region
  $region18: #{bert_forward.17} parent=0 // pred_check
    %p64 = pneg %p14
  $region19: #{bert_forward.17} parent=0 // pred_check_branch
    %66 = sbr.rel (%p64) target = $region21
  $region20: #{bert_forward.17} parent=0 // pred_region
    %v67 = vld [vmem:[#allocation2] sm:$0xff]
    %v68 = vld [vmem:[#allocation2 + $0x8] sm:$0xff]
    %v69 = vld [vmem:[%s2] sm:$0x1]
    %v71 = vperm.slane %v69, 0
    %v73 = vadd.f32 %v67, %v71
    %v74 = vadd.f32 %v68, %v71
    %75 = vst.msk [vmem:[%s3] sm:$0xff] %vm61, %v73
    %76 = vst.msk [vmem:[%s3 + $0x8] sm:$0xff] %vm61, %v74
  $region21: #{bert_forward.17} parent=0 // pred_fallthru
    _
  // Predicated region
  $region22: #{bert_forward.17} parent=0 // pred_check
    _
  $region23: #{bert_forward.17} parent=0 // pred_check_branch
    %78 = sbr.rel (0) target = $region25
  $region24: #{bert_forward.17} parent=0 // pred_region
    _
  $region25: #{bert_forward.17} parent=0 // pred_fallthru
    _
  // Predicated region
  $region26: #{bert_forward.17} parent=0 // pred_check
    _
  $region27: #{bert_forward.17} parent=0 // pred_check_branch
    %80 = sbr.rel (0) target = $region29
  $region28: #{bert_forward.17} parent=0 // pred_region
    _
  $region29: #{bert_forward.17} parent=0 // pred_fallthru
    _

// kernel: bert_forward.19
$region0: #{bert_forward.19}
  #allocation0 [shape = 'u32[]', space=smem, size = 0x4, offset = 0x4, fixed_abs, tag = 'smem constant byte address 0x4 - core index']
  #allocation1 [shape = 'u32[72,128]{1,0:T(1,128)}', space=vmem, size = 0x9000, scoped, tag = 'internal scratch']
  #allocation2 [shape = 'f32[16,32]{1,0:T(8,128)}', space=vmem, size = 0x2000, scoped, tag = 'scratch operand']
  %s0 = inlined_call_operand.vmem [shape: f32[16,32], index: 0, kind: input, shape index: {}]
  %s1 = inlined_call_operand.vmem [shape: f32[32,32], index: 1, kind: input, shape index: {}]
  %s2 = inlined_call_operand.vmem [shape: f32[1,32], index: 2, kind: input, shape index: {}]
  %s3 = inlined_call_operand.vmem [shape: f32[16,32], index: 3, kind: input, shape index: {}]
  %s4 = inlined_call_operand.vmem [shape: f32[1,32], index: 4, kind: input, shape index: {}]
  %s5 = inlined_call_operand.vmem [shape: f32[1,32], index: 5, kind: input, shape index: {}]
  %s6 = inlined_call_operand.vmem [shape: f32[16,32], index: 6, kind: output, shape index: {}]
  %s7 = sld [smem:[#allocation0]]
  $region42: #{bert_forward.19} parent=0
    _
  %s9 = ssub.s32 1, %s7
  %s10 = scalar_select 0, %s9, %s7
  // Predicated region
  $region2: #{bert_forward.19} parent=0 // pred_check
    _
  $region3: #{bert_forward.19} parent=0 // pred_check_branch
    %12 = sbr.rel (0) target = $region5
  $region4: #{bert_forward.19} parent=0 // pred_region
    _
  $region5: #{bert_forward.19} parent=0 // pred_fallthru
    _
  // Predicated region
  $region6: #{bert_forward.19} parent=0 // pred_check
    _
  $region7: #{bert_forward.19} parent=0 // pred_check_branch
    %14 = sbr.rel (0) target = $region9
  $region8: #{bert_forward.19} parent=0 // pred_region
    _
  $region9: #{bert_forward.19} parent=0 // pred_fallthru
    _
  // Predicated region
  $region10: #{bert_forward.19} parent=0 // pred_check
    _
  $region11: #{bert_forward.19} parent=0 // pred_check_branch
    %16 = sbr.rel (0) target = $region13
  $region12: #{bert_forward.19} parent=0 // pred_region
    _
  $region13: #{bert_forward.19} parent=0 // pred_fallthru
    _
  // Predicated region
  $region14: #{bert_forward.19} parent=0 // pred_check
    _
  $region15: #{bert_forward.19} parent=0 // pred_check_branch
    %18 = sbr.rel (0) target = $region17
  $region16: #{bert_forward.19} parent=0 // pred_region
    _
  $region17: #{bert_forward.19} parent=0 // pred_fallthru
    _
  // Predicated region
  $region18: #{bert_forward.19} parent=0 // pred_check
    _
  $region19: #{bert_forward.19} parent=0 // pred_check_branch
    %20 = sbr.rel (0) target = $region21
  $region20: #{bert_forward.19} parent=0 // pred_region
    _
  $region21: #{bert_forward.19} parent=0 // pred_fallthru
    _
  // Predicated region
  $region22: #{bert_forward.19} parent=0 // pred_check
    _
  $region23: #{bert_forward.19} parent=0 // pred_check_branch
    %22 = sbr.rel (0) target = $region25
  $region24: #{bert_forward.19} parent=0 // pred_region
    _
  $region25: #{bert_forward.19} parent=0 // pred_fallthru
    _
  %p23 = scmp.eq.s32.totalorder 0, 0
  // Predicated region
  $region26: #{bert_forward.19} parent=0 // pred_check
    %p24 = pneg %p23
  $region27: #{bert_forward.19} parent=0 // pred_check_branch
    %26 = sbr.rel (%p24) target = $region29
  $region28: #{bert_forward.19} parent=0 // pred_region
    %vm27 = vcmask 261120
    %28 = vst.msk [vmem:[#allocation2] sm:$0xff] %vm27, 0.0
    %29 = vst.msk [vmem:[#allocation2 + $0x8] sm:$0xff] %vm27, 0.0
  $region29: #{bert_forward.19} parent=0 // pred_fallthru
    _
  %v30 = vld [vmem:[#allocation2] sm:$0xff]
  %v31 = vld [vmem:[#allocation2 + $0x8] sm:$0xff]
  %v32 = vld [vmem:[%s0] sm:$0xff]
  %v33 = vld [vmem:[%s0 + $0x8] sm:$0xff]
  %v34 = vld [vmem:[%s1] sm:$0xff]
  %v35 = vld [vmem:[%s1 + $0x8] sm:$0xff]
  %v36 = vld [vmem:[%s1 + $0x10] sm:$0xff]
  %v37 = vld [vmem:[%s1 + $0x18] sm:$0xff]
  %vm38 = vcmask 261120
  %v40 = vsel %vm38, %v32, 0
  %v43 = vsel %vm38, %v33, 0
  %45 = vmatpush.msra.mxu0 0.0
  %46 = vmatpush.msra.mxu0 0.0
  %47 = vmatpush.msra.mxu0 0.0
  %48 = vmatpush.msra.mxu0 0.0
  %49 = vmatpush.msra.mxu0 0.0
  %50 = vmatpush.msra.mxu0 0.0
  %51 = vmatpush.msra.mxu0 0.0
  %52 = vmatpush.msra.mxu0 0.0
  %53 = vmatpush.msra.mxu0 0.0
  %54 = vmatpush.msra.mxu0 0.0
  %55 = vmatpush.msra.mxu0 0.0
  %56 = vmatpush.msra.mxu0 0.0
  %57 = vmatpush.msra.mxu0 %v37
  %58 = vmatpush.msra.mxu0 %v36
  %59 = vmatpush.msra.mxu0 %v35
  %60 = vmatpush.msra.mxu0 %v34
  %61 = vmatmul.f32.gmra.mxu0 %v40
  %v62 = vpop.f32.mrf.mxu0
  %v63 = vadd.f32 0.0, %v62
  %64 = vmatmul.f32.gmra.mxu0 %v43
  %v65 = vpop.f32.mrf.mxu0
  %v66 = vadd.f32 0.0, %v65
  %67 = vdwg.mxu0
  %v68 = vadd.f32 %v30, %v63
  %v69 = vadd.f32 %v31, %v66
  %70 = vst.msk [vmem:[#allocation2] sm:$0xff] %vm38, %v68
  %71 = vst.msk [vmem:[#allocation2 + $0x8] sm:$0xff] %vm38, %v69
  // Predicated region
  $region30: #{bert_forward.19} parent=0 // pred_check
    %p72 = pneg %p23
  $region31: #{bert_forward.19} parent=0 // pred_check_branch
    %74 = sbr.rel (%p72) target = $region33
  $region32: #{bert_forward.19} parent=0 // pred_region
    %v75 = vld [vmem:[#allocation2] sm:$0xff]
    %v76 = vld [vmem:[#allocation2 + $0x8] sm:$0xff]
    %v77 = vld [vmem:[%s2] sm:$0x1]
    %v79 = vperm.slane %v77, 0
    %v81 = vadd.f32 %v75, %v79
    %v82 = vadd.f32 %v76, %v79
    %v83 = vld [vmem:[%s3] sm:$0xff]
    %v84 = vld [vmem:[%s3 + $0x8] sm:$0xff]
    %v85 = vadd.f32 %v81, %v83
    %v86 = vadd.f32 %v82, %v84
    %v87 = vsel %vm38, %v85, 0.0
    %88 = vadd.xlane.f32.xlu0 %v87
    %v89 = vpop.xlane.xlu0 %88
    %v90 = vsel %vm38, %v86, 0.0
    %91 = vadd.xlane.f32.xlu0 %v90
    %v92 = vpop.xlane.xlu0 %91
    %v93 = vrcp.pop 32.0
    %v94 = vmul.f32 32.0, %v93
    %v95 = vsub.f32 1.0, %v94
    %v96 = vmul.f32 %v93, %v95
    %v97 = vadd.f32 %v93, %v96
    %vm98 = vweird.f32 %v93
    %v99 = vsel %vm98, %v93, %v97
    %v100 = vmul.f32 %v89, %v99
    %v101 = vmul.f32 %v92, %v99
    %v102 = vsub.f32 %v85, %v100
    %v103 = vsub.f32 %v86, %v101
    %v104 = vmul.f32 %v102, %v102
    %v105 = vmul.f32 %v103, %v103
    %v106 = vsel %vm38, %v104, 0.0
    %107 = vadd.xlane.f32.xlu0 %v106
    %v108 = vpop.xlane.xlu0 %107
    %v109 = vsel %vm38, %v105, 0.0
    %110 = vadd.xlane.f32.xlu0 %v109
    %v111 = vpop.xlane.xlu0 %110
    %v112 = vmul.f32 %v108, %v99
    %v113 = vmul.f32 %v111, %v99
    %v114 = vadd.f32 %v112, 1e-05
    %v115 = vadd.f32 %v113, 1e-05
    %v116 = vrsqrt.pop %v114
    %v117 = vmul.f32 %v116, %v114
    %v118 = vmul.f32 %v117, %v116
    %v119 = vmul.f32 0.5, %v118
    %v120 = vsub.f32 1.5, %v119
    %v121 = vmul.f32 %v116, %v120
    %vm122 = vweird.f32 %v114
    %vm123 = vweird.f32 %v116
    %vm124 = vmor %vm122, %vm123
    %v125 = vsel %vm124, %v116, %v121
    %v126 = vrsqrt.pop %v115
    %v127 = vmul.f32 %v126, %v115
    %v128 = vmul.f32 %v127, %v126
    %v129 = vmul.f32 0.5, %v128
    %v130 = vsub.f32 1.5, %v129
    %v131 = vmul.f32 %v126, %v130
    %vm132 = vweird.f32 %v115
    %vm133 = vweird.f32 %v126
    %vm134 = vmor %vm132, %vm133
    %v135 = vsel %vm134, %v126, %v131
    %v136 = vmul.f32 %v102, %v125
    %v137 = vmul.f32 %v103, %v135
    %v138 = vld [vmem:[%s4] sm:$0x1]
    %v140 = vperm.slane %v138, 0
    %v142 = vmul.f32 %v136, %v140
    %v143 = vmul.f32 %v137, %v140
    %v144 = vld [vmem:[%s5] sm:$0x1]
    %v146 = vperm.slane %v144, 0
    %v148 = vadd.f32 %v142, %v146
    %v149 = vadd.f32 %v143, %v146
    %150 = vst.msk [vmem:[%s6] sm:$0xff] %vm38, %v148
    %151 = vst.msk [vmem:[%s6 + $0x8] sm:$0xff] %vm38, %v149
  $region33: #{bert_forward.19} parent=0 // pred_fallthru
    _
  // Predicated region
  $region34: #{bert_forward.19} parent=0 // pred_check
    _
  $region35: #{bert_forward.19} parent=0 // pred_check_branch
    %153 = sbr.rel (0) target = $region37
  $region36: #{bert_forward.19} parent=0 // pred_region
    _
  $region37: #{bert_forward.19} parent=0 // pred_fallthru
    _
  // Predicated region
  $region38: #{bert_forward.19} parent=0 // pred_check
    _
  $region39: #{bert_forward.19} parent=0 // pred_check_branch
    %155 = sbr.rel (0) target = $region41
  $region40: #{bert_forward.19} parent=0 // pred_region
    _
  $region41: #{bert_forward.19} parent=0 // pred_fallthru
    _

// kernel: bert_forward.20
$region0: #{bert_forward.20}
  #allocation0 [shape = 'u32[]', space=smem, size = 0x4, offset = 0x4, fixed_abs, tag = 'smem constant byte address 0x4 - core index']
  #allocation1 [shape = 'u32[72,128]{1,0:T(1,128)}', space=vmem, size = 0x9000, scoped, tag = 'internal scratch']
  #allocation2 [shape = 'f32[16,128]{1,0:T(8,128)}', space=vmem, size = 0x2000, scoped, tag = 'scratch operand']
  %s0 = inlined_call_operand.vmem [shape: f32[16,32], index: 0, kind: input, shape index: {}]
  %s1 = inlined_call_operand.vmem [shape: f32[32,128], index: 1, kind: input, shape index: {}]
  %s2 = inlined_call_operand.vmem [shape: f32[1,128], index: 2, kind: input, shape index: {}]
  %s3 = inlined_call_operand.vmem [shape: f32[128,32], index: 3, kind: input, shape index: {}]
  %s4 = inlined_call_operand.vmem [shape: f32[1,32], index: 4, kind: input, shape index: {}]
  %s5 = inlined_call_operand.vmem [shape: f32[16,32], index: 5, kind: output, shape index: {}]
  %s6 = sld [smem:[#allocation0]]
  $region38: #{bert_forward.20} parent=0
    _
  %s8 = ssub.s32 1, %s6
  %s9 = scalar_select 0, %s8, %s6
  // Predicated region
  $region2: #{bert_forward.20} parent=0 // pred_check
    _
  $region3: #{bert_forward.20} parent=0 // pred_check_branch
    %11 = sbr.rel (0) target = $region5
  $region4: #{bert_forward.20} parent=0 // pred_region
    _
  $region5: #{bert_forward.20} parent=0 // pred_fallthru
    _
  // Predicated region
  $region6: #{bert_forward.20} parent=0 // pred_check
    _
  $region7: #{bert_forward.20} parent=0 // pred_check_branch
    %13 = sbr.rel (0) target = $region9
  $region8: #{bert_forward.20} parent=0 // pred_region
    _
  $region9: #{bert_forward.20} parent=0 // pred_fallthru
    _
  // Predicated region
  $region10: #{bert_forward.20} parent=0 // pred_check
    _
  $region11: #{bert_forward.20} parent=0 // pred_check_branch
    %15 = sbr.rel (0) target = $region13
  $region12: #{bert_forward.20} parent=0 // pred_region
    _
  $region13: #{bert_forward.20} parent=0 // pred_fallthru
    _
  // Predicated region
  $region14: #{bert_forward.20} parent=0 // pred_check
    _
  $region15: #{bert_forward.20} parent=0 // pred_check_branch
    %17 = sbr.rel (0) target = $region17
  $region16: #{bert_forward.20} parent=0 // pred_region
    _
  $region17: #{bert_forward.20} parent=0 // pred_fallthru
    _
  // Predicated region
  $region18: #{bert_forward.20} parent=0 // pred_check
    _
  $region19: #{bert_forward.20} parent=0 // pred_check_branch
    %19 = sbr.rel (0) target = $region21
  $region20: #{bert_forward.20} parent=0 // pred_region
    _
  $region21: #{bert_forward.20} parent=0 // pred_fallthru
    _
  %p20 = scmp.eq.s32.totalorder 0, 0
  // Predicated region
  $region22: #{bert_forward.20} parent=0 // pred_check
    %p21 = pneg %p20
  $region23: #{bert_forward.20} parent=0 // pred_check_branch
    %23 = sbr.rel (%p21) target = $region25
  $region24: #{bert_forward.20} parent=0 // pred_region
    %24 = vst [vmem:[#allocation2] sm:$0xff] 0.0
    %25 = vst [vmem:[#allocation2 + $0x8] sm:$0xff] 0.0
  $region25: #{bert_forward.20} parent=0 // pred_fallthru
    _
  %v26 = vld [vmem:[#allocation2] sm:$0xff]
  %v27 = vld [vmem:[#allocation2 + $0x8] sm:$0xff]
  %v28 = vld [vmem:[%s0] sm:$0xff]
  %v29 = vld [vmem:[%s0 + $0x8] sm:$0xff]
  %v30 = vld [vmem:[%s1] sm:$0xff]
  %v31 = vld [vmem:[%s1 + $0x8] sm:$0xff]
  %v32 = vld [vmem:[%s1 + $0x10] sm:$0xff]
  %v33 = vld [vmem:[%s1 + $0x18] sm:$0xff]
  %vm34 = vcmask 261120
  %v36 = vsel %vm34, %v28, 0
  %v39 = vsel %vm34, %v29, 0
  %41 = vmatpush.msra.mxu0 0.0
  %42 = vmatpush.msra.mxu0 0.0
  %43 = vmatpush.msra.mxu0 0.0
  %44 = vmatpush.msra.mxu0 0.0
  %45 = vmatpush.msra.mxu0 0.0
  %46 = vmatpush.msra.mxu0 0.0
  %47 = vmatpush.msra.mxu0 0.0
  %48 = vmatpush.msra.mxu0 0.0
  %49 = vmatpush.msra.mxu0 0.0
  %50 = vmatpush.msra.mxu0 0.0
  %51 = vmatpush.msra.mxu0 0.0
  %52 = vmatpush.msra.mxu0 0.0
  %53 = vmatpush.msra.mxu0 %v33
  %54 = vmatpush.msra.mxu0 %v32
  %55 = vmatpush.msra.mxu0 %v31
  %56 = vmatpush.msra.mxu0 %v30
  %57 = vmatmul.f32.gmra.mxu0 %v36
  %v58 = vpop.f32.mrf.mxu0
  %v59 = vadd.f32 0.0, %v58
  %60 = vmatmul.f32.gmra.mxu0 %v39
  %v61 = vpop.f32.mrf.mxu0
  %v62 = vadd.f32 0.0, %v61
  %63 = vdwg.mxu0
  %v64 = vadd.f32 %v26, %v59
  %v65 = vadd.f32 %v27, %v62
  %66 = vst [vmem:[#allocation2] sm:$0xff] %v64
  %67 = vst [vmem:[#allocation2 + $0x8] sm:$0xff] %v65
  // Predicated region
  $region26: #{bert_forward.20} parent=0 // pred_check
    %p68 = pneg %p20
  $region27: #{bert_forward.20} parent=0 // pred_check_branch
    %70 = sbr.rel (%p68) target = $region29
  $region28: #{bert_forward.20} parent=0 // pred_region
    %v71 = vld [vmem:[#allocation2] sm:$0xff]
    %v72 = vld [vmem:[#allocation2 + $0x8] sm:$0xff]
    %v73 = vld [vmem:[%s2] sm:$0x1]
    %v75 = vperm.slane %v73, 0
    %v77 = vadd.f32 %v71, %v75
    %v78 = vadd.f32 %v72, %v75
    %v79 = vmul.f32 %v77, 0.5
    %v80 = vmul.f32 %v78, 0.5
    %v81 = vmul.f32 %v77, 0.044715
    %v82 = vmul.f32 %v78, 0.044715
    %v83 = vmul.f32 %v81, %v77
    %v84 = vmul.f32 %v82, %v78
    %v85 = vmul.f32 %v83, %v77
    %v86 = vmul.f32 %v84, %v78
    %v87 = vadd.f32 %v77, %v85
    %v88 = vadd.f32 %v78, %v86
    %v89 = vmul.f32 %v87, 0.7978846
    %v90 = vmul.f32 %v88, 0.7978846
    %v91 = vtanh.pop %v89
    %v92 = vtanh.pop %v90
    %v93 = vadd.f32 %v91, 1.0
    %v94 = vadd.f32 %v92, 1.0
    %v95 = vmul.f32 %v79, %v93
    %v96 = vmul.f32 %v80, %v94
    %v97 = vld [vmem:[%s3] sm:$0xff]
    %v98 = vld [vmem:[%s3 + $0x8] sm:$0xff]
    %v99 = vld [vmem:[%s3 + $0x10] sm:$0xff]
    %v100 = vld [vmem:[%s3 + $0x18] sm:$0xff]
    %v101 = vld [vmem:[%s3 + $0x20] sm:$0xff]
    %v102 = vld [vmem:[%s3 + $0x28] sm:$0xff]
    %v103 = vld [vmem:[%s3 + $0x30] sm:$0xff]
    %v104 = vld [vmem:[%s3 + $0x38] sm:$0xff]
    %v105 = vld [vmem:[%s3 + $0x40] sm:$0xff]
    %v106 = vld [vmem:[%s3 + $0x48] sm:$0xff]
    %v107 = vld [vmem:[%s3 + $0x50] sm:$0xff]
    %v108 = vld [vmem:[%s3 + $0x58] sm:$0xff]
    %v109 = vld [vmem:[%s3 + $0x60] sm:$0xff]
    %v110 = vld [vmem:[%s3 + $0x68] sm:$0xff]
    %v111 = vld [vmem:[%s3 + $0x70] sm:$0xff]
    %v112 = vld [vmem:[%s3 + $0x78] sm:$0xff]
    %v113 = vld [vmem:[%s4] sm:$0x1]
    %v115 = vperm.slane %v113, 0
    %117 = vmatpush.msra.mxu0 %v112
    %118 = vmatpush.msra.mxu0 %v111
    %119 = vmatpush.msra.mxu0 %v110
    %120 = vmatpush.msra.mxu0 %v109
    %121 = vmatpush.msra.mxu0 %v108
    %122 = vmatpush.msra.mxu0 %v107
    %123 = vmatpush.msra.mxu0 %v106
    %124 = vmatpush.msra.mxu0 %v105
    %125 = vmatpush.msra.mxu0 %v104
    %126 = vmatpush.msra.mxu0 %v103
    %127 = vmatpush.msra.mxu0 %v102
    %128 = vmatpush.msra.mxu0 %v101
    %129 = vmatpush.msra.mxu0 %v100
    %130 = vmatpush.msra.mxu0 %v99
    %131 = vmatpush.msra.mxu0 %v98
    %132 = vmatpush.msra.mxu0 %v97
    %133 = vmatmul.f32.gmra.mxu0 %v95
    %v134 = vpop.f32.mrf.mxu0
    %v135 = vadd.f32 %v115, %v134
    %136 = vmatmul.f32.gmra.mxu0 %v96
    %v137 = vpop.f32.mrf.mxu0
    %v138 = vadd.f32 %v115, %v137
    %139 = vdwg.mxu0
    %140 = vst.msk [vmem:[%s5] sm:$0xff] %vm34, %v135
    %141 = vst.msk [vmem:[%s5 + $0x8] sm:$0xff] %vm34, %v138
  $region29: #{bert_forward.20} parent=0 // pred_fallthru
    _
  // Predicated region
  $region30: #{bert_forward.20} parent=0 // pred_check
    _
  $region31: #{bert_forward.20} parent=0 // pred_check_branch
    %143 = sbr.rel (0) target = $region33
  $region32: #{bert_forward.20} parent=0 // pred_region
    _
  $region33: #{bert_forward.20} parent=0 // pred_fallthru
    _
  // Predicated region
  $region34: #{bert_forward.20} parent=0 // pred_check
    _
  $region35: #{bert_forward.20} parent=0 // pred_check_branch
    %145 = sbr.rel (0) target = $region37
  $region36: #{bert_forward.20} parent=0 // pred_region
    _
  $region37: #{bert_forward.20} parent=0 // pred_fallthru
    _

// kernel: bert_forward.18
$region0: #{bert_forward.18}
  #allocation0 [shape = 'u32[]', space=smem, size = 0x4, offset = 0x4, fixed_abs, tag = 'smem constant byte address 0x4 - core index']
  #allocation1 [shape = 'u32[72,128]{1,0:T(1,128)}', space=vmem, size = 0x9000, scoped, tag = 'internal scratch']
  %s0 = inlined_call_operand.vmem [shape: f32[2,8,96], index: 0, kind: input, shape index: {}]
  %s1 = inlined_call_operand.vmem [shape: s32[2,1,8], index: 1, kind: input, shape index: {}]
  %s2 = inlined_call_operand.vmem [shape: f32[2,8,32], index: 2, kind: output, shape index: {0}]
  %s3 = inlined_call_operand.hbm [shape: f32[2,4,8,8], index: 3, kind: output, shape index: {1}]
  %4 = xla_tuple %s2, %s3
  %s5 = sld [smem:[#allocation0]]
  $region49: #{bert_forward.18} parent=0
    _
  %s7 = ssub.s32 1, %s5
  %s8 = scalar_select 0, %s7, %s5
  $region1: #{bert_forward.18} parent=0
    #allocation2 [shape = 'u8[32768]{0}', space=vmem, size = 0x8000, scoped, tag = 'output window, operand 1']
    #allocation3 [shape = 's32[2]{0}', space=sflag, size = 0x8, scoped, tag = 'scoped memory for bert_forward.18']
    %9 = vsyncpa [#allocation3], 0
    %s10 = scalar_lea.sflag [#allocation3], 1
    %11 = vsyncpa %s10, 0
    loop: start=0, step=1, limit=4
    $region2: #{bert_forward.18} parent=1 // loop_pre_header
      _
    $region3: #{bert_forward.18} parent=1 // loop_header
      %s13 = sphi 0, %s17
      %p14 = scmp.ge.s32.totalorder %s13, 4
      %s23 = sphi 0, %s25
      %s26 = sphi 0, %s23
      %s27 = sphi 0, %s26
      %s43 = sphi 0, %s27
      %s49 = sphi 0, %s51
      %s52 = sphi 0, %s49
      %s53 = sphi 0, %s52
      %s69 = sphi 0, %s53
      %s75 = sphi 0, %s77
      %s78 = sphi 0, %s75
      %s79 = sphi 0, %s78
      %s95 = sphi 0, %s79
      %s101 = sphi 0, %s103
      %s104 = sphi 0, %s101
      %s105 = sphi 0, %s104
      %s121 = sphi 0, %s105
    $region4: #{bert_forward.18} parent=1 // loop_header_branch
      %16 = sbr.rel (%p14) target = $region8
    $region5: #{bert_forward.18} parent=1 // loop_body
      %s18 = ssub.s32 %s13, 1
      %s19 = ssub.s32 %s13, 2
      %s20 = sadd.s32 %s13, 1
      %s21 = ssub.s32 %s13, %s20
      %p22 = scmp.eq.s32.totalorder %s21, 0
      %s24 = sadd.s32 %s23, 1
      %s25 = scalar_select %p22, %s23, %s24
      %p28 = pneg %p22
      %p29 = scmp.eq.s32.totalorder %s13, 1
      %p30 = por %p28, %p29
      %p31 = scmp.ne.s32.totalorder %s23, %s26
      %p32 = scmp.eq.s32.totalorder %s13, 0
      %p33 = por %p31, %p32
      %p34 = scmp.ne.s32.totalorder %s23, %s26
      %p35 = scmp.eq.s32.totalorder %s18, 1
      %p36 = por %p34, %p35
      %p37 = scmp.ne.s32.totalorder %s26, %s27
      %p38 = scmp.eq.s32.totalorder %s18, 0
      %p39 = por %p37, %p38
      %p40 = scmp.ne.s32.totalorder %s26, %s27
      %p41 = scmp.eq.s32.totalorder %s19, 1
      %p42 = por %p40, %p41
      %p44 = scmp.ne.s32.totalorder %s27, %s43
      %p45 = scmp.eq.s32.totalorder %s19, 0
      %p46 = por %p44, %p45
      %s47 = ssub.s32 %s13, %s20
      %p48 = scmp.eq.s32.totalorder %s47, 0
      %s50 = sadd.s32 %s49, 1
      %s51 = scalar_select %p48, %s49, %s50
      %p54 = pneg %p48
      %p55 = scmp.eq.s32.totalorder %s13, 1
      %p56 = por %p54, %p55
      %p57 = scmp.ne.s32.totalorder %s49, %s52
      %p58 = scmp.eq.s32.totalorder %s13, 0
      %p59 = por %p57, %p58
      %p60 = scmp.ne.s32.totalorder %s49, %s52
      %p61 = scmp.eq.s32.totalorder %s18, 1
      %p62 = por %p60, %p61
      %p63 = scmp.ne.s32.totalorder %s52, %s53
      %p64 = scmp.eq.s32.totalorder %s18, 0
      %p65 = por %p63, %p64
      %p66 = scmp.ne.s32.totalorder %s52, %s53
      %p67 = scmp.eq.s32.totalorder %s19, 1
      %p68 = por %p66, %p67
      %p70 = scmp.ne.s32.totalorder %s53, %s69
      %p71 = scmp.eq.s32.totalorder %s19, 0
      %p72 = por %p70, %p71
      %s73 = ssub.s32 %s13, %s20
      %p74 = scmp.eq.s32.totalorder %s73, 0
      %s76 = sadd.s32 %s75, 1
      %s77 = scalar_select %p74, %s75, %s76
      %p80 = pneg %p74
      %p81 = scmp.eq.s32.totalorder %s13, 1
      %p82 = por %p80, %p81
      %p83 = scmp.ne.s32.totalorder %s75, %s78
      %p84 = scmp.eq.s32.totalorder %s13, 0
      %p85 = por %p83, %p84
      %p86 = scmp.ne.s32.totalorder %s75, %s78
      %p87 = scmp.eq.s32.totalorder %s18, 1
      %p88 = por %p86, %p87
      %p89 = scmp.ne.s32.totalorder %s78, %s79
      %p90 = scmp.eq.s32.totalorder %s18, 0
      %p91 = por %p89, %p90
      %p92 = scmp.ne.s32.totalorder %s78, %s79
      %p93 = scmp.eq.s32.totalorder %s19, 1
      %p94 = por %p92, %p93
      %p96 = scmp.ne.s32.totalorder %s79, %s95
      %p97 = scmp.eq.s32.totalorder %s19, 0
      %p98 = por %p96, %p97
      %s99 = ssub.s32 %s13, %s20
      %p100 = scmp.eq.s32.totalorder %s99, 0
      %s102 = sadd.s32 %s101, 1
      %s103 = scalar_select %p100, %s101, %s102
      %p106 = pneg %p100
      %p107 = scmp.eq.s32.totalorder %s13, 1
      %p108 = por %p106, %p107
      %p109 = scmp.ne.s32.totalorder %s101, %s104
      %p110 = scmp.eq.s32.totalorder %s13, 0
      %p111 = por %p109, %p110
      %p112 = scmp.ne.s32.totalorder %s101, %s104
      %p113 = scmp.eq.s32.totalorder %s18, 1
      %p114 = por %p112, %p113
      %p115 = scmp.ne.s32.totalorder %s104, %s105
      %p116 = scmp.eq.s32.totalorder %s18, 0
      %p117 = por %p115, %p116
      %p118 = scmp.ne.s32.totalorder %s104, %s105
      %p119 = scmp.eq.s32.totalorder %s19, 1
      %p120 = por %p118, %p119
      %p122 = scmp.ne.s32.totalorder %s105, %s121
      %p123 = scmp.eq.s32.totalorder %s19, 0
      %p124 = por %p122, %p123
      %p125 = scmp.le.s32.totalorder 1, %s13
      %p126 = scmp.lt.s32.totalorder %s13, 3
      %p127 = pnand %p125, %p126
      %p128 = pneg %p127
      // Predicated region
      $region9: #{bert_forward.18} parent=5 // pred_check
        _
      $region10: #{bert_forward.18} parent=5 // pred_check_branch
        %130 = sbr.rel (%p127) target = $region12
      $region11: #{bert_forward.18} parent=5 // pred_region
        %s131 = ssub.s32 %s13, 1
      $region12: #{bert_forward.18} parent=5 // pred_fallthru
        _
      %p132 = scmp.lt.s32.totalorder %s13, 2
      // Predicated region
      $region13: #{bert_forward.18} parent=5 // pred_check
        %p133 = pneg %p132
      $region14: #{bert_forward.18} parent=5 // pred_check_branch
        %135 = sbr.rel (%p133) target = $region16
      $region15: #{bert_forward.18} parent=5 // pred_region
        // Predicated region
        $region17: #{bert_forward.18} parent=15 // pred_check
          %p136 = pneg %p33
        $region18: #{bert_forward.18} parent=15 // pred_check_branch
          %138 = sbr.rel (%p136) target = $region20
        $region19: #{bert_forward.18} parent=15 // pred_region
          %p139 = scmp.lt.s32.totalorder %s13, 1
          %s140 = scalar_select %p139, %s13, 1
          %s141 = smul.addr %s140, 8
          %s142 = scalar_lea.vmem %s0, %s141
        $region20: #{bert_forward.18} parent=15 // pred_fallthru
          _
        // Predicated region
        $region21: #{bert_forward.18} parent=15 // pred_check
          %p143 = pneg %p59
        $region22: #{bert_forward.18} parent=15 // pred_check_branch
          %145 = sbr.rel (%p143) target = $region24
        $region23: #{bert_forward.18} parent=15 // pred_region
          %p146 = scmp.lt.s32.totalorder %s13, 1
          %s147 = scalar_select %p146, %s13, 1
          %s148 = scalar_lea.vmem %s1, %s147
        $region24: #{bert_forward.18} parent=15 // pred_fallthru
          _
      $region16: #{bert_forward.18} parent=5 // pred_fallthru
        _
      %p149 = scmp.le.s32.totalorder 1, %s13
      %p150 = scmp.lt.s32.totalorder %s13, 3
      %p151 = pnand %p149, %p150
      %p152 = pneg %p151
      // Predicated region
      $region25: #{bert_forward.18} parent=5 // pred_check
        _
      $region26: #{bert_forward.18} parent=5 // pred_check_branch
        %154 = sbr.rel (%p151) target = $region28
      $region27: #{bert_forward.18} parent=5 // pred_region
        %s155 = ssub.s32 %s13, 1
        %p156 = scmp.lt.s32.totalorder %s18, 1
        %s157 = scalar_select %p156, %s18, 1
        %s158 = smul.addr %s157, 8
        %s159 = scalar_lea.vmem %s0, %s158
        %p160 = pneg %p39
        %p161 = pneg %p36
        %p162 = scmp.lt.s32.totalorder %s18, 1
        %s163 = scalar_select %p162, %s18, 1
        %s164 = scalar_lea.vmem %s1, %s163
        %p165 = pneg %p65
        %p166 = pneg %p62
        %p167 = pneg %p91
        %p168 = pneg %p88
        %p169 = scmp.lt.s32.totalorder %s18, 1
        %s170 = scalar_select %p169, %s18, 1
        %s171 = smul.addr %s170, 8
        %s172 = scalar_lea.vmem %s2, %s171
        %p173 = pneg %p117
        %p174 = pneg %p114
        %s175 = sand.u32 %s104, 1
        %s176 = scalar_lea.sflag [#allocation3], %s175
        %s177 = sand.u32 %s104, 1
        %s178 = smul.addr %s177, 32
        %s179 = scalar_lea.vmem [#allocation2], %s178
        %p180 = scmp.lt.s32.totalorder %s18, 1
        %s181 = scalar_select %p180, %s18, 1
        %s182 = smul.addr %s181, 8
        %s183 = scalar_lea.vmem %s0, %s182
        %p184 = scmp.lt.s32.totalorder %s18, 1
        %s185 = scalar_select %p184, %s18, 1
        %s186 = scalar_lea.vmem %s1, %s185
        %p187 = scmp.lt.s32.totalorder %s18, 1
        %s188 = scalar_select %p187, %s18, 1
        %s189 = smul.addr %s188, 8
        %s190 = scalar_lea.vmem %s2, %s189
        %v191 = vld [vmem:[%s183] sm:$0xff]
        %v192 = vld [vmem:[%s186] sm:$0x1]
        %vm193 = vcmp.gt.s32.totalorder %v192, 0
        %195 = vrot.lane.b32.xlu0 %v191, 96
        %v196 = vpop.permute.xlu0 %195
        %vm197 = vcmask 64512
        %v198 = vsel %vm197, %v191, 0
        %v200 = vsel %vm197, %v196, 0
        %202 = vmatpush.xpose.msra.mxu0 0.0
        %203 = vmatpush.xpose.msra.mxu0 0.0
        %204 = vmatpush.xpose.msra.mxu0 0.0
        %205 = vmatpush.xpose.msra.mxu0 0.0
        %206 = vmatpush.xpose.msra.mxu0 0.0
        %207 = vmatpush.xpose.msra.mxu0 0.0
        %208 = vmatpush.xpose.msra.mxu0 0.0
        %209 = vmatpush.xpose.msra.mxu0 0.0
        %210 = vmatpush.xpose.msra.mxu0 0.0
        %211 = vmatpush.xpose.msra.mxu0 0.0
        %212 = vmatpush.xpose.msra.mxu0 0.0
        %213 = vmatpush.xpose.msra.mxu0 0.0
        %214 = vmatpush.xpose.msra.mxu0 0.0
        %215 = vmatpush.xpose.msra.mxu0 0.0
        %216 = vmatpush.xpose.msra.mxu0 0.0
        %217 = vmatpush.xpose.msra.mxu0 %v200
        %218 = vmatmul.f32.gmra.mxu0 %v198
        %v219 = vpop.f32.mrf.mxu0
        %v220 = vadd.f32 0.0, %v219
        %221 = vdwg.mxu0
        %v222 = vmul.f32 %v220, 0.015625
        %v223 = vsel %vm193, 1, 0
        %v224 = vperm.slane %v223, 0
        %vm225 = vcmp.eq.s32.totalorder %v224, 1
        %v226 = vsel %vm225, -1e+09, %v222
        %v227 = vsel %vm197, %v226, -inf
        %228 = vmax.xlane.f32.xlu0 %v227
        %v229 = vpop.xlane.xlu0 %228
        %v230 = vsub.f32 %v226, %v229
        %v231 = vmul.f32 %v230, 1.442695
        %v232 = vpow.pop %v231
        %v233 = vsel %vm197, %v232, 0.0
        %234 = vadd.xlane.f32.xlu0 %v233
        %v235 = vpop.xlane.xlu0 %234
        %v236 = vrcp.pop %v235
        %v237 = vmul.f32 %v232, %v236
        %238 = vst.msk [vmem:[%s179] sm:$0xff] %vm197, %v237
        %239 = vrot.lane.b32.xlu0 %v191, 64
        %v240 = vpop.permute.xlu0 %239
        %v243 = vsel %vm197, %v237, 0
        %245 = vmatpush.msra.mxu0 0.0
        %246 = vmatpush.msra.mxu0 0.0
        %247 = vmatpush.msra.mxu0 0.0
        %248 = vmatpush.msra.mxu0 0.0
        %249 = vmatpush.msra.mxu0 0.0
        %250 = vmatpush.msra.mxu0 0.0
        %251 = vmatpush.msra.mxu0 0.0
        %252 = vmatpush.msra.mxu0 0.0
        %253 = vmatpush.msra.mxu0 0.0
        %254 = vmatpush.msra.mxu0 0.0
        %255 = vmatpush.msra.mxu0 0.0
        %256 = vmatpush.msra.mxu0 0.0
        %257 = vmatpush.msra.mxu0 0.0
        %258 = vmatpush.msra.mxu0 0.0
        %259 = vmatpush.msra.mxu0 0.0
        %260 = vmatpush.msra.mxu0 %v240
        %261 = vmatmul.f32.gmra.mxu0 %v243
        %v262 = vpop.f32.mrf.mxu0
        %v263 = vadd.f32 0.0, %v262
        %264 = vdwg.mxu0
        %265 = vrot.lane.b32.xlu0 %v191, 120
        %v266 = vpop.permute.xlu0 %265
        %267 = vrot.lane.b32.xlu0 %v191, 88
        %v268 = vpop.permute.xlu0 %267
        %v269 = vsel %vm197, %v266, 0
        %v271 = vsel %vm197, %v268, 0
        %273 = vmatpush.xpose.msra.mxu0 0.0
        %274 = vmatpush.xpose.msra.mxu0 0.0
        %275 = vmatpush.xpose.msra.mxu0 0.0
        %276 = vmatpush.xpose.msra.mxu0 0.0
        %277 = vmatpush.xpose.msra.mxu0 0.0
        %278 = vmatpush.xpose.msra.mxu0 0.0
        %279 = vmatpush.xpose.msra.mxu0 0.0
        %280 = vmatpush.xpose.msra.mxu0 0.0
        %281 = vmatpush.xpose.msra.mxu0 0.0
        %282 = vmatpush.xpose.msra.mxu0 0.0
        %283 = vmatpush.xpose.msra.mxu0 0.0
        %284 = vmatpush.xpose.msra.mxu0 0.0
        %285 = vmatpush.xpose.msra.mxu0 0.0
        %286 = vmatpush.xpose.msra.mxu0 0.0
        %287 = vmatpush.xpose.msra.mxu0 0.0
        %288 = vmatpush.xpose.msra.mxu0 %v271
        %289 = vmatmul.f32.gmra.mxu0 %v269
        %v290 = vpop.f32.mrf.mxu0
        %v291 = vadd.f32 0.0, %v290
        %292 = vdwg.mxu0
        %v293 = vmul.f32 %v291, 0.015625
        %v294 = vsel %vm225, -1e+09, %v293
        %v295 = vsel %vm197, %v294, -inf
        %296 = vmax.xlane.f32.xlu0 %v295
        %v297 = vpop.xlane.xlu0 %296
        %v298 = vsub.f32 %v294, %v297
        %v299 = vmul.f32 %v298, 1.442695
        %v300 = vpow.pop %v299
        %v301 = vsel %vm197, %v300, 0.0
        %302 = vadd.xlane.f32.xlu0 %v301
        %v303 = vpop.xlane.xlu0 %302
        %v304 = vrcp.pop %v303
        %v305 = vmul.f32 %v300, %v304
        %s306 = scalar_lea.vmem %s179, 8 [#allocation2]
        %307 = vst.msk [vmem:[%s306] sm:$0xff] %vm197, %v305
        %308 = vrot.lane.b32.xlu0 %v191, 56
        %v309 = vpop.permute.xlu0 %308
        %v312 = vsel %vm197, %v305, 0
        %314 = vmatpush.msra.mxu0 0.0
        %315 = vmatpush.msra.mxu0 0.0
        %316 = vmatpush.msra.mxu0 0.0
        %317 = vmatpush.msra.mxu0 0.0
        %318 = vmatpush.msra.mxu0 0.0
        %319 = vmatpush.msra.mxu0 0.0
        %320 = vmatpush.msra.mxu0 0.0
        %321 = vmatpush.msra.mxu0 0.0
        %322 = vmatpush.msra.mxu0 0.0
        %323 = vmatpush.msra.mxu0 0.0
        %324 = vmatpush.msra.mxu0 0.0
        %325 = vmatpush.msra.mxu0 0.0
        %326 = vmatpush.msra.mxu0 0.0
        %327 = vmatpush.msra.mxu0 0.0
        %328 = vmatpush.msra.mxu0 0.0
        %329 = vmatpush.msra.mxu0 %v309
        %330 = vmatmul.f32.gmra.mxu0 %v312
        %v331 = vpop.f32.mrf.mxu0
        %v332 = vadd.f32 0.0, %v331
        %333 = vdwg.mxu0
        %334 = vrot.lane.b32.xlu0 %v191, 112
        %v335 = vpop.permute.xlu0 %334
        %336 = vrot.lane.b32.xlu0 %v191, 80
        %v337 = vpop.permute.xlu0 %336
        %v338 = vsel %vm197, %v335, 0
        %v340 = vsel %vm197, %v337, 0
        %342 = vmatpush.xpose.msra.mxu0 0.0
        %343 = vmatpush.xpose.msra.mxu0 0.0
        %344 = vmatpush.xpose.msra.mxu0 0.0
        %345 = vmatpush.xpose.msra.mxu0 0.0
        %346 = vmatpush.xpose.msra.mxu0 0.0
        %347 = vmatpush.xpose.msra.mxu0 0.0
        %348 = vmatpush.xpose.msra.mxu0 0.0
        %349 = vmatpush.xpose.msra.mxu0 0.0
        %350 = vmatpush.xpose.msra.mxu0 0.0
        %351 = vmatpush.xpose.msra.mxu0 0.0
        %352 = vmatpush.xpose.msra.mxu0 0.0
        %353 = vmatpush.xpose.msra.mxu0 0.0
        %354 = vmatpush.xpose.msra.mxu0 0.0
        %355 = vmatpush.xpose.msra.mxu0 0.0
        %356 = vmatpush.xpose.msra.mxu0 0.0
        %357 = vmatpush.xpose.msra.mxu0 %v340
        %358 = vmatmul.f32.gmra.mxu0 %v338
        %v359 = vpop.f32.mrf.mxu0
        %v360 = vadd.f32 0.0, %v359
        %361 = vdwg.mxu0
        %v362 = vmul.f32 %v360, 0.015625
        %v363 = vsel %vm225, -1e+09, %v362
        %v364 = vsel %vm197, %v363, -inf
        %365 = vmax.xlane.f32.xlu0 %v364
        %v366 = vpop.xlane.xlu0 %365
        %v367 = vsub.f32 %v363, %v366
        %v368 = vmul.f32 %v367, 1.442695
        %v369 = vpow.pop %v368
        %v370 = vsel %vm197, %v369, 0.0
        %371 = vadd.xlane.f32.xlu0 %v370
        %v372 = vpop.xlane.xlu0 %371
        %v373 = vrcp.pop %v372
        %v374 = vmul.f32 %v369, %v373
        %s375 = scalar_lea.vmem %s179, 16 [#allocation2]
        %376 = vst.msk [vmem:[%s375] sm:$0xff] %vm197, %v374
        %377 = vrot.lane.b32.xlu0 %v191, 48
        %v378 = vpop.permute.xlu0 %377
        %v381 = vsel %vm197, %v374, 0
        %383 = vmatpush.msra.mxu0 0.0
        %384 = vmatpush.msra.mxu0 0.0
        %385 = vmatpush.msra.mxu0 0.0
        %386 = vmatpush.msra.mxu0 0.0
        %387 = vmatpush.msra.mxu0 0.0
        %388 = vmatpush.msra.mxu0 0.0
        %389 = vmatpush.msra.mxu0 0.0
        %390 = vmatpush.msra.mxu0 0.0
        %391 = vmatpush.msra.mxu0 0.0
        %392 = vmatpush.msra.mxu0 0.0
        %393 = vmatpush.msra.mxu0 0.0
        %394 = vmatpush.msra.mxu0 0.0
        %395 = vmatpush.msra.mxu0 0.0
        %396 = vmatpush.msra.mxu0 0.0
        %397 = vmatpush.msra.mxu0 0.0
        %398 = vmatpush.msra.mxu0 %v378
        %399 = vmatmul.f32.gmra.mxu0 %v381
        %v400 = vpop.f32.mrf.mxu0
        %v401 = vadd.f32 0.0, %v400
        %402 = vdwg.mxu0
        %403 = vrot.lane.b32.xlu0 %v191, 104
        %v404 = vpop.permute.xlu0 %403
        %405 = vrot.lane.b32.xlu0 %v191, 72
        %v406 = vpop.permute.xlu0 %405
        %v407 = vsel %vm197, %v404, 0
        %v409 = vsel %vm197, %v406, 0
        %411 = vmatpush.xpose.msra.mxu0 0.0
        %412 = vmatpush.xpose.msra.mxu0 0.0
        %413 = vmatpush.xpose.msra.mxu0 0.0
        %414 = vmatpush.xpose.msra.mxu0 0.0
        %415 = vmatpush.xpose.msra.mxu0 0.0
        %416 = vmatpush.xpose.msra.mxu0 0.0
        %417 = vmatpush.xpose.msra.mxu0 0.0
        %418 = vmatpush.xpose.msra.mxu0 0.0
        %419 = vmatpush.xpose.msra.mxu0 0.0
        %420 = vmatpush.xpose.msra.mxu0 0.0
        %421 = vmatpush.xpose.msra.mxu0 0.0
        %422 = vmatpush.xpose.msra.mxu0 0.0
        %423 = vmatpush.xpose.msra.mxu0 0.0
        %424 = vmatpush.xpose.msra.mxu0 0.0
        %425 = vmatpush.xpose.msra.mxu0 0.0
        %426 = vmatpush.xpose.msra.mxu0 %v409
        %427 = vmatmul.f32.gmra.mxu0 %v407
        %v428 = vpop.f32.mrf.mxu0
        %v429 = vadd.f32 0.0, %v428
        %430 = vdwg.mxu0
        %v431 = vmul.f32 %v429, 0.015625
        %v432 = vsel %vm225, -1e+09, %v431
        %v433 = vsel %vm197, %v432, -inf
        %434 = vmax.xlane.f32.xlu0 %v433
        %v435 = vpop.xlane.xlu0 %434
        %v436 = vsub.f32 %v432, %v435
        %v437 = vmul.f32 %v436, 1.442695
        %v438 = vpow.pop %v437
        %v439 = vsel %vm197, %v438, 0.0
        %440 = vadd.xlane.f32.xlu0 %v439
        %v441 = vpop.xlane.xlu0 %440
        %v442 = vrcp.pop %v441
        %v443 = vmul.f32 %v438, %v442
        %s444 = scalar_lea.vmem %s179, 24 [#allocation2]
        %445 = vst.msk [vmem:[%s444] sm:$0xff] %vm197, %v443
        %446 = vrot.lane.b32.xlu0 %v191, 40
        %v447 = vpop.permute.xlu0 %446
        %v450 = vsel %vm197, %v443, 0
        %452 = vmatpush.msra.mxu0 0.0
        %453 = vmatpush.msra.mxu0 0.0
        %454 = vmatpush.msra.mxu0 0.0
        %455 = vmatpush.msra.mxu0 0.0
        %456 = vmatpush.msra.mxu0 0.0
        %457 = vmatpush.msra.mxu0 0.0
        %458 = vmatpush.msra.mxu0 0.0
        %459 = vmatpush.msra.mxu0 0.0
        %460 = vmatpush.msra.mxu0 0.0
        %461 = vmatpush.msra.mxu0 0.0
        %462 = vmatpush.msra.mxu0 0.0
        %463 = vmatpush.msra.mxu0 0.0
        %464 = vmatpush.msra.mxu0 0.0
        %465 = vmatpush.msra.mxu0 0.0
        %466 = vmatpush.msra.mxu0 0.0
        %467 = vmatpush.msra.mxu0 %v447
        %468 = vmatmul.f32.gmra.mxu0 %v450
        %v469 = vpop.f32.mrf.mxu0
        %v470 = vadd.f32 0.0, %v469
        %471 = vdwg.mxu0
        %473 = vrot.lane.b32.xlu0 %v332, 8
        %v474 = vpop.permute.xlu0 %473
        %477 = vrot.lane.b32.xlu0 %v401, 16
        %v478 = vpop.permute.xlu0 %477
        %481 = vrot.lane.b32.xlu0 %v470, 24
        %v482 = vpop.permute.xlu0 %481
        %v484 = vsel %vm197, %v263, %v474
        %vm485 = vcmask 130048
        %v486 = vsel %vm485, %v484, %v478
        %vm487 = vcmask 195584
        %v488 = vsel %vm487, %v486, %v482
        %vm489 = vcmask 261120
        %490 = vst.msk [vmem:[%s190] sm:$0xff] %vm489, %v488
        %p491 = scmp.lt.s32.totalorder %s18, 1
        %s492 = scalar_select %p491, %s18, 1
        %s493 = smul.addr %s492, 8
        %s494 = scalar_lea.vmem %s2, %s493
        %s495 = sand.u32 %s104, 1
        %s496 = scalar_lea.sflag [#allocation3], %s495
        %s497 = sand.u32 %s104, 1
        %s498 = smul.addr %s497, 32
        %s499 = scalar_lea.vmem [#allocation2], %s498
        // Predicated region
        $region29: #{bert_forward.18} parent=27 // pred_check
          %p500 = pneg %p88
        $region30: #{bert_forward.18} parent=27 // pred_check_branch
          %502 = sbr.rel (%p500) target = $region32
        $region31: #{bert_forward.18} parent=27 // pred_region
          _
        $region32: #{bert_forward.18} parent=27 // pred_fallthru
          _
        // Predicated region
        $region33: #{bert_forward.18} parent=27 // pred_check
          %p503 = pneg %p114
        $region34: #{bert_forward.18} parent=27 // pred_check_branch
          %505 = sbr.rel (%p503) target = $region36
        $region35: #{bert_forward.18} parent=27 // pred_region
          %507 = vsyncadd %s496, 0
          %s508 = smul.addr %s18, 4
          %s509 = smul.addr %s508, 8
          %s510 = scalar_lea.hbm %s3, %s509
          %s511 = sshll.u32 %s499, 4
          %s512 = int_to_ptr.vmem [resolvable:$true] %s511
          %s513 = sshll.u32 %s510, 4
          %s514 = int_to_ptr.hbm [resolvable:$true] %s513
          %519 = dma.vmem_to_hbm [thread:$0]  %s512, 512, %s514, %s496, 128, 128, 8
        $region36: #{bert_forward.18} parent=27 // pred_fallthru
          _
      $region28: #{bert_forward.18} parent=5 // pred_fallthru
        _
      %p520 = scmp.le.s32.totalorder 2, %s13
      // Predicated region
      $region37: #{bert_forward.18} parent=5 // pred_check
        %p521 = pneg %p520
      $region38: #{bert_forward.18} parent=5 // pred_check_branch
        %523 = sbr.rel (%p521) target = $region40
      $region39: #{bert_forward.18} parent=5 // pred_region
        %s524 = ssub.s32 %s13, 2
        // Predicated region
        $region41: #{bert_forward.18} parent=39 // pred_check
          %p525 = pneg %p94
        $region42: #{bert_forward.18} parent=39 // pred_check_branch
          %527 = sbr.rel (%p525) target = $region44
        $region43: #{bert_forward.18} parent=39 // pred_region
          %p528 = scmp.lt.s32.totalorder %s19, 1
          %s529 = scalar_select %p528, %s19, 1
          %s530 = smul.addr %s529, 8
          %s531 = scalar_lea.vmem %s2, %s530
        $region44: #{bert_forward.18} parent=39 // pred_fallthru
          _
        // Predicated region
        $region45: #{bert_forward.18} parent=39 // pred_check
          %p532 = pneg %p120
        $region46: #{bert_forward.18} parent=39 // pred_check_branch
          %534 = sbr.rel (%p532) target = $region48
        $region47: #{bert_forward.18} parent=39 // pred_region
          %s535 = sand.u32 %s105, 1
          %s536 = scalar_lea.sflag [#allocation3], %s535
          %s537 = sand.u32 %s105, 1
          %s538 = smul.addr %s537, 32
          %s539 = scalar_lea.vmem [#allocation2], %s538
          %541 = dma.done %s536, 512
        $region48: #{bert_forward.18} parent=39 // pred_fallthru
          _
      $region40: #{bert_forward.18} parent=5 // pred_fallthru
        _
    $region6: #{bert_forward.18} parent=1 // loop_footer
      %s17 = sadd.s32 1, %s13
    $region7: #{bert_forward.18} parent=1 // loop_footer_branch
      %12 = sbr.rel target = $region3
    $region8: #{bert_forward.18} parent=1 // loop_exit
      _
    %542 = vsyncpa [#allocation3], 1
    %s543 = scalar_lea.sflag [#allocation3], 1
    %544 = vsyncpa %s543, 1

// kernel: bert_forward.33
$region0: #{bert_forward.33}
  #allocation0 [shape = 'u32[]', space=smem, size = 0x4, offset = 0x4, fixed_abs, tag = 'smem constant byte address 0x4 - core index']
  #allocation1 [shape = 'u32[72,128]{1,0:T(1,128)}', space=vmem, size = 0x9000, scoped, tag = 'internal scratch']
  #allocation2 [shape = 'f32[2,32]{1,0:T(2,128)}', space=vmem, size = 0x400, scoped, tag = 'scratch operand']
  %s0 = inlined_call_operand.vmem [shape: f32[2,32], index: 0, kind: input, shape index: {}]
  %s1 = inlined_call_operand.vmem [shape: f32[32,32], index: 1, kind: input, shape index: {}]
  %s2 = inlined_call_operand.vmem [shape: f32[1,32], index: 2, kind: input, shape index: {}]
  %s3 = inlined_call_operand.hbm [shape: f32[2,32], index: 3, kind: output, shape index: {}]
  %s4 = sld [smem:[#allocation0]]
  $region30: #{bert_forward.33} parent=0
    _
  %s6 = ssub.s32 1, %s4
  %s7 = scalar_select 0, %s6, %s4
  $region1: #{bert_forward.33} parent=0
    #allocation3 [shape = 'u8[1024]{0}', space=vmem, size = 0x400, scoped, tag = 'output window, operand 0, single buffered']
    #allocation4 [shape = 's32[1]{0}', space=sflag, size = 0x4, scoped, tag = 'scoped memory for bert_forward.33']
    %8 = vsyncpa [#allocation4], 0
    // Predicated region
    $region2: #{bert_forward.33} parent=1 // pred_check
      _
    $region3: #{bert_forward.33} parent=1 // pred_check_branch
      %10 = sbr.rel (0) target = $region5
    $region4: #{bert_forward.33} parent=1 // pred_region
      _
    $region5: #{bert_forward.33} parent=1 // pred_fallthru
      _
    // Predicated region
    $region6: #{bert_forward.33} parent=1 // pred_check
      _
    $region7: #{bert_forward.33} parent=1 // pred_check_branch
      %12 = sbr.rel (0) target = $region9
    $region8: #{bert_forward.33} parent=1 // pred_region
      _
    $region9: #{bert_forward.33} parent=1 // pred_fallthru
      _
    // Predicated region
    $region10: #{bert_forward.33} parent=1 // pred_check
      _
    $region11: #{bert_forward.33} parent=1 // pred_check_branch
      %14 = sbr.rel (0) target = $region13
    $region12: #{bert_forward.33} parent=1 // pred_region
      _
    $region13: #{bert_forward.33} parent=1 // pred_fallthru
      _
    %p15 = scmp.eq.s32.totalorder 0, 0
    // Predicated region
    $region14: #{bert_forward.33} parent=1 // pred_check
      %p16 = pneg %p15
    $region15: #{bert_forward.33} parent=1 // pred_check_branch
      %18 = sbr.rel (%p16) target = $region17
    $region16: #{bert_forward.33} parent=1 // pred_region
      %vm19 = vcmask 254976
      %20 = vst.msk [vmem:[#allocation2] sm:$0x3] %vm19, 0.0
    $region17: #{bert_forward.33} parent=1 // pred_fallthru
      _
    %v21 = vld [vmem:[#allocation2] sm:$0x3]
    %v22 = vld [vmem:[%s0] sm:$0x3]
    %v23 = vld [vmem:[%s1] sm:$0xff]
    %v24 = vld [vmem:[%s1 + $0x8] sm:$0xff]
    %v25 = vld [vmem:[%s1 + $0x10] sm:$0xff]
    %v26 = vld [vmem:[%s1 + $0x18] sm:$0xff]
    %vm27 = vcmask 261120
    %v29 = vsel %vm27, %v22, 0
    %31 = vmatpush.msra.mxu0 0.0
    %32 = vmatpush.msra.mxu0 0.0
    %33 = vmatpush.msra.mxu0 0.0
    %34 = vmatpush.msra.mxu0 0.0
    %35 = vmatpush.msra.mxu0 0.0
    %36 = vmatpush.msra.mxu0 0.0
    %37 = vmatpush.msra.mxu0 0.0
    %38 = vmatpush.msra.mxu0 0.0
    %39 = vmatpush.msra.mxu0 0.0
    %40 = vmatpush.msra.mxu0 0.0
    %41 = vmatpush.msra.mxu0 0.0
    %42 = vmatpush.msra.mxu0 0.0
    %43 = vmatpush.msra.mxu0 %v26
    %44 = vmatpush.msra.mxu0 %v25
    %45 = vmatpush.msra.mxu0 %v24
    %46 = vmatpush.msra.mxu0 %v23
    %47 = vmatmul.f32.gmra.mxu0 %v29
    %v48 = vpop.f32.mrf.mxu0
    %v49 = vadd.f32 0.0, %v48
    %50 = vdwg.mxu0
    %v51 = vadd.f32 %v21, %v49
    %vm52 = vcmask 254976
    %53 = vst.msk [vmem:[#allocation2] sm:$0x3] %vm52, %v51
    // Predicated region
    $region18: #{bert_forward.33} parent=1 // pred_check
      %p54 = pneg %p15
    $region19: #{bert_forward.33} parent=1 // pred_check_branch
      %56 = sbr.rel (%p54) target = $region21
    $region20: #{bert_forward.33} parent=1 // pred_region
      %v57 = vld [vmem:[#allocation2] sm:$0x3]
      %v58 = vld [vmem:[%s2] sm:$0x1]
      %v60 = vperm.slane %v58, 0
      %v62 = vadd.f32 %v57, %v60
      %v63 = vtanh.pop %v62
      %64 = vst.msk [vmem:[#allocation3] sm:$0x3] %vm52, %v63
    $region21: #{bert_forward.33} parent=1 // pred_fallthru
      _
    // Predicated region
    $region22: #{bert_forward.33} parent=1 // pred_check
      _
    $region23: #{bert_forward.33} parent=1 // pred_check_branch
      %66 = sbr.rel (0) target = $region25
    $region24: #{bert_forward.33} parent=1 // pred_region
      %68 = vsyncadd [#allocation4], 0
      %s70 = sshll.u32 [#allocation3], 4
      %s71 = int_to_ptr.vmem [resolvable:$true] %s70
      %s72 = sshll.u32 %s3, 4
      %s73 = int_to_ptr.hbm [resolvable:$true] %s72
      %75 = dma.vmem_to_hbm [thread:$0]  %s71, 32, %s73, [#allocation4]
    $region25: #{bert_forward.33} parent=1 // pred_fallthru
      _
    // Predicated region
    $region26: #{bert_forward.33} parent=1 // pred_check
      _
    $region27: #{bert_forward.33} parent=1 // pred_check_branch
      %77 = sbr.rel (0) target = $region29
    $region28: #{bert_forward.33} parent=1 // pred_region
      %79 = dma.done [#allocation4], 32
    $region29: #{bert_forward.33} parent=1 // pred_fallthru
      _
    %80 = vsyncpa [#allocation4], 1

</llo_original>
